<compile_context>
chip_gen: v5e
topology: v5e:2x2
jax: 0.10.0
libtpu: 0.0.40
codegen_flags: <defaults>
</compile_context>

<pallas_src>
import numpy as np
import jax
import jax.numpy as jnp
from jax import lax
from jax.experimental import pallas as pl
from jax.experimental.pallas import tpu as pltpu

# ----------------------------------------------------------------------------------
# Synthetic agent description (mirrors the dict the torch module expects)
# ----------------------------------------------------------------------------------
AGENT = {
    'num_node': 3,
    'state_dim': 6,
    'act_dim': 2,
    'state_position': {'root': [0, 1], 'leg1': [2, 3], 'leg2': [4, 5]},
    'action_position': {'root': [], 'leg1': [0], 'leg2': [1]},
    'node_type': {'root': 'root', 'leg1': 'limb', 'leg2': 'limb'},
    'node_type_state_action_len': {'root': 2, 'limb': 3},
    'edge': [[0, 1], [0, 2]],
}
MAX_LENGTH = 8
MAX_EP_LENGTH = 20
PROMPT_LENGTH = 0          # forward is exercised with prompt=None
HIDDEN = 32
FFN = HIDDEN * 4
N_LAYERS = 2
NUM_HEADS = 1
LN_EPS = 1e-5
NEG_BIAS = np.float32(-1e9)

NODE_LIST = list(AGENT['state_position'].keys())
NUM_NODE = AGENT['num_node']


# ----------------------------------------------------------------------------------
# Mask construction (host-side numpy, exact re-implementation of the torch helpers)
# ----------------------------------------------------------------------------------
def get_structural_mask_np(agent, max_length, prompt_length):
    n = agent['num_node']
    T = max_length + prompt_length
    L = n * T
    mask = np.ones((L, L), dtype=bool)
    for t in range(T):
        for (a, b) in agent['edge']:
            mask[t * n + a, t * n + b] = False
            mask[t * n + b, t * n + a] = False
    return mask


def get_temporal_mask_list_np(num_node, max_length, prompt_length):
    T = max_length + prompt_length
    L = num_node * T
    masks = []
    for num_zero in range(max_length):
        te = np.tril(np.ones((T, T)))
        te[:, prompt_length:prompt_length + num_zero] = 0
        te[prompt_length:prompt_length + num_zero, :] = 0
        rows, cols = np.nonzero(te)
        mask = np.ones((L, L), dtype=bool)
        for i in range(num_node):
            mask[rows * num_node + i, cols * num_node + i] = False
        mask[:num_node * prompt_length, :num_node * prompt_length] = True
        masks.append(mask)
    return masks


def build_mask_store(agent, max_length, prompt_length):
    structural = get_structural_mask_np(agent, max_length, prompt_length)
    temporal_list = get_temporal_mask_list_np(agent['num_node'], max_length, prompt_length)
    # torch: mask = ~(~structural + ~temporal)  ==  structural & temporal
    return np.stack([structural & tm for tm in temporal_list], axis=0)


_MASK_STORE_BOOL = build_mask_store(AGENT, MAX_LENGTH, PROMPT_LENGTH)   # (max_len, L, L) bool
# Additive f32 bias store (True = blocked -> -1e9), built once at module init.
_MASK_BIAS_NP = np.where(_MASK_STORE_BOOL, NEG_BIAS, np.float32(0.0)).astype(np.float32)


# ----------------------------------------------------------------------------------
# Fused Pallas kernel: embed-LN + N_LAYERS post-LN encoder layers + prediction head
# ----------------------------------------------------------------------------------
def gpdt_fused_kernel(x_ref, nz_ref, store_ref, eln_ref, wqkv_ref, wo_ref,
                      w1_ref, w2_ref, vec_ref, pred_ref, o_ref):
    # x_ref    : (B*L, H) f32          pre-embed-LN tokens, batch folded into rows
    # nz_ref   : (B,) int32 (SMEM)     per-batch padded-step count
    # store_ref: (max_len, L, B*L) f32 additive mask-bias store, pre-tiled along lanes
    # eln_ref  : (2, H) f32            embed_ln gamma / beta
    # wqkv_ref : (NL, H, 3H) bf16
    # wo_ref   : (NL, H, H)  bf16
    # w1_ref   : (NL, H, F)  bf16
    # w2_ref   : (NL, F, H)  bf16      untransposed -> plain NN matmul
    # vec_ref  : (NL, 8, 128) f32      rows: bqkv, bo, g1, be1, b1, b2, g2, be2
    # pred_ref : (2, H) f32            row0 = limb-head weight, row1[0] = limb-head bias
    # o_ref    : (B*L, 1) f32          tanh(limb head) for every token row
    L = store_ref.shape[1]
    BL = store_ref.shape[2]
    B = BL // L
    H = x_ref.shape[1]
    scale = jnp.float32(1.0 / np.sqrt(H))        # num_heads == 1 -> head_dim == H

    def _ln(y, g, b):
        mu = jnp.mean(y, axis=-1, keepdims=True)
        ms = jnp.mean(y * y, axis=-1, keepdims=True)
        return (y - mu) * lax.rsqrt(ms - mu * mu + LN_EPS) * g + b

    x = _ln(x_ref[...], eln_ref[0:1, :], eln_ref[1:2, :])           # embed_ln

    # --- block-diagonal additive attention bias, built once in-kernel ---
    rows = [store_ref[nz_ref[b]] for b in range(B)]                 # B x (L, B*L)
    bias_rows = jnp.concatenate(rows, axis=0)                       # (B*L, B*L)
    r = lax.broadcasted_iota(jnp.int32, (BL, BL), 0)
    c = lax.broadcasted_iota(jnp.int32, (BL, BL), 1)
    same = None
    for b in range(B):
        lo, hi = b * L, (b + 1) * L
        in_b = (r >= lo) & (r < hi) & (c >= lo) & (c < hi)
        same = in_b if same is None else (same | in_b)
    bias = jnp.where(same, bias_rows, jnp.float32(NEG_BIAS))        # (B*L, B*L)

    for layer in range(N_LAYERS):                                   # static unroll
        wqkv, wo = wqkv_ref[layer], wo_ref[layer]
        w1, w2 = w1_ref[layer], w2_ref[layer]
        vec = vec_ref[layer]
        bqkv = vec[0:1, 0:3 * H]
        bo = vec[1:2, 0:H]
        g1, be1 = vec[2:3, 0:H], vec[3:4, 0:H]
        b1 = vec[4:5, :]
        b2 = vec[5:6, 0:H]
        g2, be2 = vec[6:7, 0:H], vec[7:8, 0:H]

        # fused QKV projection over the whole (B*L, H) slab (single MXU push)
        qkv = jnp.dot(x.astype(jnp.bfloat16), wqkv,
                      preferred_element_type=jnp.float32) + bqkv    # (B*L, 3H)
        q = qkv[:, 0:H] * scale
        k = qkv[:, H:2 * H]
        v = qkv[:, 2 * H:3 * H]

        # batch-fused masked attention: one scores matmul + one P@V matmul
        s = lax.dot_general(q.astype(jnp.bfloat16), k.astype(jnp.bfloat16),
                            (((1,), (1,)), ((), ())),
                            preferred_element_type=jnp.float32) + bias
        s = s - jnp.max(s, axis=-1, keepdims=True)
        p = jnp.exp(s)
        p = p * pl.reciprocal(jnp.sum(p, axis=-1, keepdims=True), approx=True)
        a = jnp.dot(p.astype(jnp.bfloat16), v.astype(jnp.bfloat16),
                    preferred_element_type=jnp.float32)             # (B*L, H)
        a = jnp.dot(a.astype(jnp.bfloat16), wo,
                    preferred_element_type=jnp.float32) + bo

        x = _ln(x + a, g1, be1)                                     # residual + post-LN 1

        # feed-forward (relu); W2 applied untransposed (plain NN matmul)
        h = jnp.dot(x.astype(jnp.bfloat16), w1,
                    preferred_element_type=jnp.float32) + b1
        h = jnp.maximum(h, 0.0)
        h = jnp.dot(h.astype(jnp.bfloat16), w2,
                    preferred_element_type=jnp.float32) + b2

        x = _ln(x + h, g2, be2)                                     # residual + post-LN 2

    # --- fused prediction head: tanh(x . w_limb + b_limb), action_size == 1 ---
    pw = pred_ref[0:1, :]                                           # (1, H)
    pb = pred_ref[1:2, 0:1]                                         # (1, 1)
    o_ref[...] = jnp.tanh(jnp.sum(x * pw, axis=-1, keepdims=True) + pb)


def pallas_gpdt_transformer(x2d, num_zeros, store_tiled, params):
    BL = x2d.shape[0]
    vmem = pl.BlockSpec(memory_space=pltpu.MemorySpace.VMEM)
    smem = pl.BlockSpec(memory_space=pltpu.MemorySpace.SMEM)
    return pl.pallas_call(
        gpdt_fused_kernel,
        out_shape=jax.ShapeDtypeStruct((BL, 1), jnp.float32),
        in_specs=[vmem, smem, vmem, vmem, vmem, vmem, vmem, vmem, vmem, vmem],
        out_specs=vmem,
    )(x2d, num_zeros, store_tiled,
      params['eln_slab'], params['wqkv_slab'], params['wo_slab'],
      params['w1_slab'], params['w2_slab'], params['vec_slab'], params['pred_slab'])


# ----------------------------------------------------------------------------------
# Deterministic parameter initialization (synthetic — shapes follow the torch module)
# ----------------------------------------------------------------------------------
def init_params(key):
    def nxt():
        nonlocal key
        key, sub = jax.random.split(key)
        return sub

    def rnd(shape, scale=0.05):
        return (scale * jax.random.normal(nxt(), shape)).astype(jnp.float32)

    def pad128(v):
        v = v.reshape(1, -1)
        if v.shape[1] < 128:
            v = jnp.concatenate([v, jnp.zeros((1, 128 - v.shape[1]), jnp.float32)], axis=1)
        return v

    params = {}
    # per-node-type embedding linears (stored pre-transposed: (in, H))
    params['embed_net'] = {}
    for nt, sa_len in AGENT['node_type_state_action_len'].items():
        params['embed_net'][nt] = {'w': rnd((sa_len, HIDDEN)), 'b': rnd((HIDDEN,))}
    params['embed_return'] = {'w': rnd((1, HIDDEN)), 'b': rnd((HIDDEN,))}
    params['embed_timestep'] = rnd((MAX_EP_LENGTH, HIDDEN))
    params['eln_slab'] = jnp.concatenate(
        [jnp.ones((1, HIDDEN), jnp.float32), jnp.zeros((1, HIDDEN), jnp.float32)], axis=0)

    # prediction head: both non-root nodes share the 'limb' head, Linear(H, 1) + Tanh
    action_size = len(AGENT['action_position'][NODE_LIST[1]])
    assert action_size == 1
    pred_w = rnd((HIDDEN, action_size))
    pred_b = rnd((action_size,))
    params['pred_slab'] = jnp.concatenate(
        [pred_w.T,
         jnp.concatenate([pred_b.reshape(1, 1),
                          jnp.zeros((1, HIDDEN - 1), jnp.float32)], axis=1)], axis=0)

    # transformer encoder layers, packed into lane-aligned per-role slabs
    wqkv_l, wo_l, w1_l, w2_l, vec_l = [], [], [], [], []
    for _ in range(N_LAYERS):
        wq, wk, wv = rnd((HIDDEN, HIDDEN)), rnd((HIDDEN, HIDDEN)), rnd((HIDDEN, HIDDEN))
        wo = rnd((HIDDEN, HIDDEN))
        bq, bk, bv, bo = rnd((HIDDEN,)), rnd((HIDDEN,)), rnd((HIDDEN,)), rnd((HIDDEN,))
        g1, be1 = jnp.ones((HIDDEN,), jnp.float32), jnp.zeros((HIDDEN,), jnp.float32)
        g2, be2 = jnp.ones((HIDDEN,), jnp.float32), jnp.zeros((HIDDEN,), jnp.float32)
        w1, b1 = rnd((HIDDEN, FFN)), rnd((FFN,))
        w2, b2 = rnd((FFN, HIDDEN)), rnd((HIDDEN,))

        wqkv_l.append(jnp.concatenate([wq, wk, wv], axis=1))            # (H, 3H)
        wo_l.append(wo)                                                  # (H, H)
        w1_l.append(w1)                                                  # (H, F)
        w2_l.append(w2)                                                  # (F, H) untransposed
        vec_l.append(jnp.concatenate(
            [pad128(jnp.concatenate([bq, bk, bv])), pad128(bo),
             pad128(g1), pad128(be1), pad128(b1),
             pad128(b2), pad128(g2), pad128(be2)], axis=0))              # (8, 128)

    params['wqkv_slab'] = jnp.stack(wqkv_l, 0).astype(jnp.bfloat16)      # (NL, H, 3H)
    params['wo_slab'] = jnp.stack(wo_l, 0).astype(jnp.bfloat16)          # (NL, H, H)
    params['w1_slab'] = jnp.stack(w1_l, 0).astype(jnp.bfloat16)          # (NL, H, F)
    params['w2_slab'] = jnp.stack(w2_l, 0).astype(jnp.bfloat16)          # (NL, F, H)
    params['vec_slab'] = jnp.stack(vec_l, 0)                             # (NL, 8, 128) f32
    return params


# ----------------------------------------------------------------------------------
# Forward pass (mirrors GPDT_V2_Torch.forward with prompt=None, eval mode)
# ----------------------------------------------------------------------------------
def gpdt_v2_forward(params, states, actions, returns_to_go, timesteps, attention_mask=None):
    states = states[:, :, :AGENT['state_dim']]
    B, T = states.shape[0], states.shape[1]
    assert T == MAX_LENGTH and PROMPT_LENGTH == 0
    if attention_mask is None:
        attention_mask = jnp.ones((B, T), dtype=jnp.int32)
    acts = actions[:, :-1, :]

    # per-node state/action gather + node-type embedding linear (tiny, stays in XLA)
    node_embs = []
    for node in NODE_LIST:
        ns = states[:, :, np.array(AGENT['state_position'][node], dtype=np.int32)]
        ap = AGENT['action_position'][node]
        if len(ap) > 0:
            na = acts[:, :, np.array(ap, dtype=np.int32)]
            feat = jnp.concatenate([ns, na], axis=2)
        else:
            feat = ns
        nt = AGENT['node_type'][node]
        node_embs.append(feat @ params['embed_net'][nt]['w'] + params['embed_net'][nt]['b'])
    node_embs = jnp.stack(node_embs, axis=2)                             # (B, T, N, H)

    time_emb = params['embed_timestep'][timesteps]                       # (B, T, H)
    rtg_emb = returns_to_go @ params['embed_return']['w'] + params['embed_return']['b']
    x = node_embs + rtg_emb[:, :, None, :] + time_emb[:, :, None, :]

    L = T * NUM_NODE
    x2d = x.reshape(B * L, HIDDEN)                                        # batch folded into rows

    # per-batch padded-step count; mask selection happens inside the kernel
    num_zeros = (T - jnp.sum(attention_mask, axis=1)).astype(jnp.int32)
    # TODO(synk): torch indexes mask_store[num_zeros] and would raise for an all-padding
    # sequence (num_zeros == max_length); we clamp to the last valid mask instead.
    num_zeros = jnp.clip(num_zeros, 0, MAX_LENGTH - 1)

    # pre-tiled additive bias store (compile-time constant, keyed on B)
    store_tiled = jnp.asarray(np.tile(_MASK_BIAS_NP, (1, 1, B)))          # (max_len, L, B*L)

    # fused: embed_ln + all encoder layers + prediction head in ONE pallas_call
    pred2d = pallas_gpdt_transformer(x2d, num_zeros, store_tiled, params)  # (B*L, 1)
    action_preds = pred2d.reshape(B, T, NUM_NODE)[:, :, 1:]               # non-root nodes

    state_preds, reward_preds = 0.0, 0.0
    return state_preds, action_preds[:, -T:, :], reward_preds


# ----------------------------------------------------------------------------------
if __name__ == "__main__":
    params = init_params(jax.random.PRNGKey(0))

    B, T = 2, MAX_LENGTH
    k1, k2, k3 = jax.random.split(jax.random.PRNGKey(0), 3)
    states = jax.random.normal(k1, (B, T, AGENT['state_dim']), dtype=jnp.float32)
    actions = jax.random.normal(k2, (B, T + 1, AGENT['act_dim']), dtype=jnp.float32)
    returns_to_go = jax.random.normal(k3, (B, T, 1), dtype=jnp.float32)
    timesteps = jnp.tile(jnp.arange(T, dtype=jnp.int32), (B, 1))
    attention_mask = jnp.stack([
        jnp.ones((T,), dtype=jnp.int32),                                             # 0 padded steps
        jnp.concatenate([jnp.zeros((2,), jnp.int32), jnp.ones((T - 2,), jnp.int32)]),  # 2 padded
    ], axis=0)

    fwd = jax.jit(gpdt_v2_forward)
    _, action_preds, _ = fwd(params, states, actions, returns_to_go, timesteps, attention_mask)
    jax.block_until_ready(action_preds)
    assert action_preds.shape == (B, T, NUM_NODE - 1)
    assert bool(jnp.all(jnp.isfinite(action_preds)))
    print("KERNEL_OK")
</pallas_src>

<mosaic_0001>
module attributes {stable_mosaic.version = 11 : i64} {
  func.func @gpdt_fused_kernel(%arg0: memref<48x32xf32, #tpu.memory_space<vmem>>, %arg1: memref<2xi32, #tpu.memory_space<smem>>, %arg2: memref<8x24x48xf32, #tpu.memory_space<vmem>>, %arg3: memref<2x32xf32, #tpu.memory_space<vmem>>, %arg4: memref<2x32x96xbf16, #tpu.memory_space<vmem>>, %arg5: memref<2x32x32xbf16, #tpu.memory_space<vmem>>, %arg6: memref<2x32x128xbf16, #tpu.memory_space<vmem>>, %arg7: memref<2x128x32xbf16, #tpu.memory_space<vmem>>, %arg8: memref<2x8x128xf32, #tpu.memory_space<vmem>>, %arg9: memref<2x32xf32, #tpu.memory_space<vmem>>, %arg10: memref<48x1xf32, #tpu.memory_space<vmem>>) attributes {dimension_semantics = [], scalar_prefetch = 0 : i64, scratch_operands = 0 : i64, tpu.core_type = #tpu.core_type<tc>} {
    %c0 = arith.constant 0 : index
    %c0_0 = arith.constant 0 : index
    %0 = vector.load %arg0[%c0, %c0_0] : memref<48x32xf32, #tpu.memory_space<vmem>>, vector<48x32xf32>
    %c0_1 = arith.constant 0 : index
    %c0_2 = arith.constant 0 : index
    %1 = vector.load %arg3[%c0_1, %c0_2] : memref<2x32xf32, #tpu.memory_space<vmem>>, vector<1x32xf32>
    %c1 = arith.constant 1 : index
    %c0_3 = arith.constant 0 : index
    %2 = vector.load %arg3[%c1, %c0_3] : memref<2x32xf32, #tpu.memory_space<vmem>>, vector<1x32xf32>
    %cst = arith.constant dense<0.000000e+00> : vector<48xf32>
    %3 = vector.multi_reduction <add>, %0, %cst [1] : vector<48x32xf32> to vector<48xf32>
    %4 = vector.shape_cast %3 : vector<48xf32> to vector<48x1xf32>
    %cst_4 = arith.constant 3.200000e+01 : f32
    %5 = vector.broadcast %cst_4 : f32 to vector<48x1xf32>
    %6 = arith.divf %4, %5 : vector<48x1xf32>
    %7 = arith.mulf %0, %0 : vector<48x32xf32>
    %cst_5 = arith.constant dense<0.000000e+00> : vector<48xf32>
    %8 = vector.multi_reduction <add>, %7, %cst_5 [1] : vector<48x32xf32> to vector<48xf32>
    %9 = vector.shape_cast %8 : vector<48xf32> to vector<48x1xf32>
    %cst_6 = arith.constant 3.200000e+01 : f32
    %10 = vector.broadcast %cst_6 : f32 to vector<48x1xf32>
    %11 = arith.divf %9, %10 : vector<48x1xf32>
    %12 = vector.broadcast %6 : vector<48x1xf32> to vector<48x32xf32>
    %13 = arith.subf %0, %12 : vector<48x32xf32>
    %14 = arith.mulf %6, %6 : vector<48x1xf32>
    %15 = arith.subf %11, %14 : vector<48x1xf32>
    %cst_7 = arith.constant 9.99999974E-6 : f32
    %16 = vector.broadcast %cst_7 : f32 to vector<48x1xf32>
    %17 = arith.addf %15, %16 : vector<48x1xf32>
    %18 = math.rsqrt %17 : vector<48x1xf32>
    %19 = vector.broadcast %18 : vector<48x1xf32> to vector<48x32xf32>
    %20 = arith.mulf %13, %19 : vector<48x32xf32>
    %21 = vector.broadcast %1 : vector<1x32xf32> to vector<48x32xf32>
    %22 = arith.mulf %20, %21 : vector<48x32xf32>
    %23 = vector.broadcast %2 : vector<1x32xf32> to vector<48x32xf32>
    %24 = arith.addf %22, %23 : vector<48x32xf32>
    %c0_8 = arith.constant 0 : index
    %25 = memref.load %arg1[%c0_8] : memref<2xi32, #tpu.memory_space<smem>>
    %26 = arith.index_cast %25 : i32 to index
    %c0_9 = arith.constant 0 : index
    %c0_10 = arith.constant 0 : index
    %27 = vector.load %arg2[%26, %c0_9, %c0_10] : memref<8x24x48xf32, #tpu.memory_space<vmem>>, vector<1x24x48xf32>
    %28 = vector.shape_cast %27 : vector<1x24x48xf32> to vector<24x48xf32>
    %c1_11 = arith.constant 1 : index
    %29 = memref.load %arg1[%c1_11] : memref<2xi32, #tpu.memory_space<smem>>
    %30 = arith.index_cast %29 : i32 to index
    %c0_12 = arith.constant 0 : index
    %c0_13 = arith.constant 0 : index
    %31 = vector.load %arg2[%30, %c0_12, %c0_13] : memref<8x24x48xf32, #tpu.memory_space<vmem>>, vector<1x24x48xf32>
    %32 = vector.shape_cast %31 : vector<1x24x48xf32> to vector<24x48xf32>
    %33 = tpu.concatenate %28, %32 in 0 : vector<24x48xf32>, vector<24x48xf32> -> vector<48x48xf32>
    %34 = tpu.iota {dimensions = array<i32: 0>} : vector<48x48xi32>
    %35 = tpu.iota {dimensions = array<i32: 1>} : vector<48x48xi32>
    %c0_i32 = arith.constant 0 : i32
    %36 = vector.broadcast %c0_i32 : i32 to vector<48x48xi32>
    %37 = arith.cmpi sge, %34, %36 : vector<48x48xi32>
    %c24_i32 = arith.constant 24 : i32
    %38 = vector.broadcast %c24_i32 : i32 to vector<48x48xi32>
    %39 = arith.cmpi slt, %34, %38 : vector<48x48xi32>
    %40 = arith.andi %37, %39 : vector<48x48xi1>
    %c0_i32_14 = arith.constant 0 : i32
    %41 = vector.broadcast %c0_i32_14 : i32 to vector<48x48xi32>
    %42 = arith.cmpi sge, %35, %41 : vector<48x48xi32>
    %43 = arith.andi %40, %42 : vector<48x48xi1>
    %c24_i32_15 = arith.constant 24 : i32
    %44 = vector.broadcast %c24_i32_15 : i32 to vector<48x48xi32>
    %45 = arith.cmpi slt, %35, %44 : vector<48x48xi32>
    %46 = arith.andi %43, %45 : vector<48x48xi1>
    %c24_i32_16 = arith.constant 24 : i32
    %47 = vector.broadcast %c24_i32_16 : i32 to vector<48x48xi32>
    %48 = arith.cmpi sge, %34, %47 : vector<48x48xi32>
    %c48_i32 = arith.constant 48 : i32
    %49 = vector.broadcast %c48_i32 : i32 to vector<48x48xi32>
    %50 = arith.cmpi slt, %34, %49 : vector<48x48xi32>
    %51 = arith.andi %48, %50 : vector<48x48xi1>
    %c24_i32_17 = arith.constant 24 : i32
    %52 = vector.broadcast %c24_i32_17 : i32 to vector<48x48xi32>
    %53 = arith.cmpi sge, %35, %52 : vector<48x48xi32>
    %54 = arith.andi %51, %53 : vector<48x48xi1>
    %c48_i32_18 = arith.constant 48 : i32
    %55 = vector.broadcast %c48_i32_18 : i32 to vector<48x48xi32>
    %56 = arith.cmpi slt, %35, %55 : vector<48x48xi32>
    %57 = arith.andi %54, %56 : vector<48x48xi1>
    %58 = arith.ori %46, %57 : vector<48x48xi1>
    %cst_19 = arith.constant -1.000000e+09 : f32
    %59 = vector.broadcast %cst_19 : f32 to vector<48x48xf32>
    %60 = arith.select %58, %33, %59 : vector<48x48xi1>, vector<48x48xf32>
    %c0_20 = arith.constant 0 : index
    %c0_21 = arith.constant 0 : index
    %c0_22 = arith.constant 0 : index
    %61 = vector.load %arg4[%c0_20, %c0_21, %c0_22] : memref<2x32x96xbf16, #tpu.memory_space<vmem>>, vector<1x32x96xbf16>
    %62 = vector.shape_cast %61 : vector<1x32x96xbf16> to vector<32x96xbf16>
    %c0_23 = arith.constant 0 : index
    %c0_24 = arith.constant 0 : index
    %c0_25 = arith.constant 0 : index
    %63 = vector.load %arg5[%c0_23, %c0_24, %c0_25] : memref<2x32x32xbf16, #tpu.memory_space<vmem>>, vector<1x32x32xbf16>
    %64 = vector.shape_cast %63 : vector<1x32x32xbf16> to vector<32x32xbf16>
    %c0_26 = arith.constant 0 : index
    %c0_27 = arith.constant 0 : index
    %c0_28 = arith.constant 0 : index
    %65 = vector.load %arg6[%c0_26, %c0_27, %c0_28] : memref<2x32x128xbf16, #tpu.memory_space<vmem>>, vector<1x32x128xbf16>
    %66 = vector.shape_cast %65 : vector<1x32x128xbf16> to vector<32x128xbf16>
    %c0_29 = arith.constant 0 : index
    %c0_30 = arith.constant 0 : index
    %c0_31 = arith.constant 0 : index
    %67 = vector.load %arg7[%c0_29, %c0_30, %c0_31] : memref<2x128x32xbf16, #tpu.memory_space<vmem>>, vector<1x128x32xbf16>
    %68 = vector.shape_cast %67 : vector<1x128x32xbf16> to vector<128x32xbf16>
    %c0_32 = arith.constant 0 : index
    %c0_33 = arith.constant 0 : index
    %c0_34 = arith.constant 0 : index
    %69 = vector.load %arg8[%c0_32, %c0_33, %c0_34] : memref<2x8x128xf32, #tpu.memory_space<vmem>>, vector<1x8x128xf32>
    %70 = vector.shape_cast %69 : vector<1x8x128xf32> to vector<8x128xf32>
    %71 = vector.extract_strided_slice %70 {offsets = [0, 0], sizes = [1, 96], strides = [1, 1]} : vector<8x128xf32> to vector<1x96xf32>
    %72 = vector.extract_strided_slice %70 {offsets = [1, 0], sizes = [1, 32], strides = [1, 1]} : vector<8x128xf32> to vector<1x32xf32>
    %73 = vector.extract_strided_slice %70 {offsets = [2, 0], sizes = [1, 32], strides = [1, 1]} : vector<8x128xf32> to vector<1x32xf32>
    %74 = vector.extract_strided_slice %70 {offsets = [3, 0], sizes = [1, 32], strides = [1, 1]} : vector<8x128xf32> to vector<1x32xf32>
    %75 = vector.extract_strided_slice %70 {offsets = [4, 0], sizes = [1, 128], strides = [1, 1]} : vector<8x128xf32> to vector<1x128xf32>
    %76 = vector.extract_strided_slice %70 {offsets = [5, 0], sizes = [1, 32], strides = [1, 1]} : vector<8x128xf32> to vector<1x32xf32>
    %77 = vector.extract_strided_slice %70 {offsets = [6, 0], sizes = [1, 32], strides = [1, 1]} : vector<8x128xf32> to vector<1x32xf32>
    %78 = vector.extract_strided_slice %70 {offsets = [7, 0], sizes = [1, 32], strides = [1, 1]} : vector<8x128xf32> to vector<1x32xf32>
    %79 = arith.truncf %24 : vector<48x32xf32> to vector<48x32xbf16>
    %cst_35 = arith.constant dense<0.000000e+00> : vector<48x96xf32>
    %80 = tpu.matmul %79, %62, %cst_35 {dimension_numbers = #tpu.dot_dimension_numbers<[1], [0], [0], [1], [0, 0, 1, 1], [], []>} : vector<48x32xbf16>, vector<32x96xbf16>, vector<48x96xf32> -> vector<48x96xf32>
    %81 = vector.broadcast %71 : vector<1x96xf32> to vector<48x96xf32>
    %82 = arith.addf %80, %81 : vector<48x96xf32>
    %83 = vector.extract_strided_slice %82 {offsets = [0, 0], sizes = [48, 32], strides = [1, 1]} : vector<48x96xf32> to vector<48x32xf32>
    %cst_36 = arith.constant 0.176776692 : f32
    %84 = vector.broadcast %cst_36 : f32 to vector<48x32xf32>
    %85 = arith.mulf %83, %84 : vector<48x32xf32>
    %86 = vector.extract_strided_slice %82 {offsets = [0, 32], sizes = [48, 32], strides = [1, 1]} : vector<48x96xf32> to vector<48x32xf32>
    %87 = vector.extract_strided_slice %82 {offsets = [0, 64], sizes = [48, 32], strides = [1, 1]} : vector<48x96xf32> to vector<48x32xf32>
    %88 = arith.truncf %85 : vector<48x32xf32> to vector<48x32xbf16>
    %89 = arith.truncf %86 : vector<48x32xf32> to vector<48x32xbf16>
    %cst_37 = arith.constant dense<0.000000e+00> : vector<48x48xf32>
    %90 = tpu.matmul %88, %89, %cst_37 {dimension_numbers = #tpu.dot_dimension_numbers<[1], [1], [0], [0], [0, 0, 1, 0], [], []>} : vector<48x32xbf16>, vector<48x32xbf16>, vector<48x48xf32> -> vector<48x48xf32>
    %91 = arith.addf %90, %60 : vector<48x48xf32>
    %cst_38 = arith.constant dense<0xFF800000> : vector<48xf32>
    %92 = vector.multi_reduction <maximumf>, %91, %cst_38 [1] : vector<48x48xf32> to vector<48xf32>
    %93 = vector.shape_cast %92 : vector<48xf32> to vector<48x1xf32>
    %94 = vector.broadcast %93 : vector<48x1xf32> to vector<48x48xf32>
    %95 = arith.subf %91, %94 : vector<48x48xf32>
    %96 = math.exp %95 : vector<48x48xf32>
    %cst_39 = arith.constant dense<0.000000e+00> : vector<48xf32>
    %97 = vector.multi_reduction <add>, %96, %cst_39 [1] : vector<48x48xf32> to vector<48xf32>
    %98 = vector.shape_cast %97 : vector<48xf32> to vector<48x1xf32>
    %99 = tpu.reciprocal %98 {approx = true} : vector<48x1xf32> -> vector<48x1xf32>
    %100 = vector.broadcast %99 : vector<48x1xf32> to vector<48x48xf32>
    %101 = arith.mulf %96, %100 : vector<48x48xf32>
    %102 = arith.truncf %101 : vector<48x48xf32> to vector<48x48xbf16>
    %103 = arith.truncf %87 : vector<48x32xf32> to vector<48x32xbf16>
    %cst_40 = arith.constant dense<0.000000e+00> : vector<48x32xf32>
    %104 = tpu.matmul %102, %103, %cst_40 {dimension_numbers = #tpu.dot_dimension_numbers<[1], [0], [0], [1], [0, 0, 1, 1], [], []>} : vector<48x48xbf16>, vector<48x32xbf16>, vector<48x32xf32> -> vector<48x32xf32>
    %105 = arith.truncf %104 : vector<48x32xf32> to vector<48x32xbf16>
    %cst_41 = arith.constant dense<0.000000e+00> : vector<48x32xf32>
    %106 = tpu.matmul %105, %64, %cst_41 {dimension_numbers = #tpu.dot_dimension_numbers<[1], [0], [0], [1], [0, 0, 1, 1], [], []>} : vector<48x32xbf16>, vector<32x32xbf16>, vector<48x32xf32> -> vector<48x32xf32>
    %107 = vector.broadcast %72 : vector<1x32xf32> to vector<48x32xf32>
    %108 = arith.addf %106, %107 : vector<48x32xf32>
    %109 = arith.addf %24, %108 : vector<48x32xf32>
    %cst_42 = arith.constant dense<0.000000e+00> : vector<48xf32>
    %110 = vector.multi_reduction <add>, %109, %cst_42 [1] : vector<48x32xf32> to vector<48xf32>
    %111 = vector.shape_cast %110 : vector<48xf32> to vector<48x1xf32>
    %cst_43 = arith.constant 3.200000e+01 : f32
    %112 = vector.broadcast %cst_43 : f32 to vector<48x1xf32>
    %113 = arith.divf %111, %112 : vector<48x1xf32>
    %114 = arith.mulf %109, %109 : vector<48x32xf32>
    %cst_44 = arith.constant dense<0.000000e+00> : vector<48xf32>
    %115 = vector.multi_reduction <add>, %114, %cst_44 [1] : vector<48x32xf32> to vector<48xf32>
    %116 = vector.shape_cast %115 : vector<48xf32> to vector<48x1xf32>
    %cst_45 = arith.constant 3.200000e+01 : f32
    %117 = vector.broadcast %cst_45 : f32 to vector<48x1xf32>
    %118 = arith.divf %116, %117 : vector<48x1xf32>
    %119 = vector.broadcast %113 : vector<48x1xf32> to vector<48x32xf32>
    %120 = arith.subf %109, %119 : vector<48x32xf32>
    %121 = arith.mulf %113, %113 : vector<48x1xf32>
    %122 = arith.subf %118, %121 : vector<48x1xf32>
    %cst_46 = arith.constant 9.99999974E-6 : f32
    %123 = vector.broadcast %cst_46 : f32 to vector<48x1xf32>
    %124 = arith.addf %122, %123 : vector<48x1xf32>
    %125 = math.rsqrt %124 : vector<48x1xf32>
    %126 = vector.broadcast %125 : vector<48x1xf32> to vector<48x32xf32>
    %127 = arith.mulf %120, %126 : vector<48x32xf32>
    %128 = vector.broadcast %73 : vector<1x32xf32> to vector<48x32xf32>
    %129 = arith.mulf %127, %128 : vector<48x32xf32>
    %130 = vector.broadcast %74 : vector<1x32xf32> to vector<48x32xf32>
    %131 = arith.addf %129, %130 : vector<48x32xf32>
    %132 = arith.truncf %131 : vector<48x32xf32> to vector<48x32xbf16>
    %cst_47 = arith.constant dense<0.000000e+00> : vector<48x128xf32>
    %133 = tpu.matmul %132, %66, %cst_47 {dimension_numbers = #tpu.dot_dimension_numbers<[1], [0], [0], [1], [0, 0, 1, 1], [], []>} : vector<48x32xbf16>, vector<32x128xbf16>, vector<48x128xf32> -> vector<48x128xf32>
    %134 = vector.broadcast %75 : vector<1x128xf32> to vector<48x128xf32>
    %135 = arith.addf %133, %134 : vector<48x128xf32>
    %cst_48 = arith.constant 0.000000e+00 : f32
    %136 = vector.broadcast %cst_48 : f32 to vector<48x128xf32>
    %137 = arith.maximumf %135, %136 : vector<48x128xf32>
    %138 = arith.truncf %137 : vector<48x128xf32> to vector<48x128xbf16>
    %cst_49 = arith.constant dense<0.000000e+00> : vector<48x32xf32>
    %139 = tpu.matmul %138, %68, %cst_49 {dimension_numbers = #tpu.dot_dimension_numbers<[1], [0], [0], [1], [0, 0, 1, 1], [], []>} : vector<48x128xbf16>, vector<128x32xbf16>, vector<48x32xf32> -> vector<48x32xf32>
    %140 = vector.broadcast %76 : vector<1x32xf32> to vector<48x32xf32>
    %141 = arith.addf %139, %140 : vector<48x32xf32>
    %142 = arith.addf %131, %141 : vector<48x32xf32>
    %cst_50 = arith.constant dense<0.000000e+00> : vector<48xf32>
    %143 = vector.multi_reduction <add>, %142, %cst_50 [1] : vector<48x32xf32> to vector<48xf32>
    %144 = vector.shape_cast %143 : vector<48xf32> to vector<48x1xf32>
    %cst_51 = arith.constant 3.200000e+01 : f32
    %145 = vector.broadcast %cst_51 : f32 to vector<48x1xf32>
    %146 = arith.divf %144, %145 : vector<48x1xf32>
    %147 = arith.mulf %142, %142 : vector<48x32xf32>
    %cst_52 = arith.constant dense<0.000000e+00> : vector<48xf32>
    %148 = vector.multi_reduction <add>, %147, %cst_52 [1] : vector<48x32xf32> to vector<48xf32>
    %149 = vector.shape_cast %148 : vector<48xf32> to vector<48x1xf32>
    %cst_53 = arith.constant 3.200000e+01 : f32
    %150 = vector.broadcast %cst_53 : f32 to vector<48x1xf32>
    %151 = arith.divf %149, %150 : vector<48x1xf32>
    %152 = vector.broadcast %146 : vector<48x1xf32> to vector<48x32xf32>
    %153 = arith.subf %142, %152 : vector<48x32xf32>
    %154 = arith.mulf %146, %146 : vector<48x1xf32>
    %155 = arith.subf %151, %154 : vector<48x1xf32>
    %cst_54 = arith.constant 9.99999974E-6 : f32
    %156 = vector.broadcast %cst_54 : f32 to vector<48x1xf32>
    %157 = arith.addf %155, %156 : vector<48x1xf32>
    %158 = math.rsqrt %157 : vector<48x1xf32>
    %159 = vector.broadcast %158 : vector<48x1xf32> to vector<48x32xf32>
    %160 = arith.mulf %153, %159 : vector<48x32xf32>
    %161 = vector.broadcast %77 : vector<1x32xf32> to vector<48x32xf32>
    %162 = arith.mulf %160, %161 : vector<48x32xf32>
    %163 = vector.broadcast %78 : vector<1x32xf32> to vector<48x32xf32>
    %164 = arith.addf %162, %163 : vector<48x32xf32>
    %c1_55 = arith.constant 1 : index
    %c0_56 = arith.constant 0 : index
    %c0_57 = arith.constant 0 : index
    %165 = vector.load %arg4[%c1_55, %c0_56, %c0_57] : memref<2x32x96xbf16, #tpu.memory_space<vmem>>, vector<1x32x96xbf16>
    %166 = vector.shape_cast %165 : vector<1x32x96xbf16> to vector<32x96xbf16>
    %c1_58 = arith.constant 1 : index
    %c0_59 = arith.constant 0 : index
    %c0_60 = arith.constant 0 : index
    %167 = vector.load %arg5[%c1_58, %c0_59, %c0_60] : memref<2x32x32xbf16, #tpu.memory_space<vmem>>, vector<1x32x32xbf16>
    %168 = vector.shape_cast %167 : vector<1x32x32xbf16> to vector<32x32xbf16>
    %c1_61 = arith.constant 1 : index
    %c0_62 = arith.constant 0 : index
    %c0_63 = arith.constant 0 : index
    %169 = vector.load %arg6[%c1_61, %c0_62, %c0_63] : memref<2x32x128xbf16, #tpu.memory_space<vmem>>, vector<1x32x128xbf16>
    %170 = vector.shape_cast %169 : vector<1x32x128xbf16> to vector<32x128xbf16>
    %c1_64 = arith.constant 1 : index
    %c0_65 = arith.constant 0 : index
    %c0_66 = arith.constant 0 : index
    %171 = vector.load %arg7[%c1_64, %c0_65, %c0_66] : memref<2x128x32xbf16, #tpu.memory_space<vmem>>, vector<1x128x32xbf16>
    %172 = vector.shape_cast %171 : vector<1x128x32xbf16> to vector<128x32xbf16>
    %c1_67 = arith.constant 1 : index
    %c0_68 = arith.constant 0 : index
    %c0_69 = arith.constant 0 : index
    %173 = vector.load %arg8[%c1_67, %c0_68, %c0_69] : memref<2x8x128xf32, #tpu.memory_space<vmem>>, vector<1x8x128xf32>
    %174 = vector.shape_cast %173 : vector<1x8x128xf32> to vector<8x128xf32>
    %175 = vector.extract_strided_slice %174 {offsets = [0, 0], sizes = [1, 96], strides = [1, 1]} : vector<8x128xf32> to vector<1x96xf32>
    %176 = vector.extract_strided_slice %174 {offsets = [1, 0], sizes = [1, 32], strides = [1, 1]} : vector<8x128xf32> to vector<1x32xf32>
    %177 = vector.extract_strided_slice %174 {offsets = [2, 0], sizes = [1, 32], strides = [1, 1]} : vector<8x128xf32> to vector<1x32xf32>
    %178 = vector.extract_strided_slice %174 {offsets = [3, 0], sizes = [1, 32], strides = [1, 1]} : vector<8x128xf32> to vector<1x32xf32>
    %179 = vector.extract_strided_slice %174 {offsets = [4, 0], sizes = [1, 128], strides = [1, 1]} : vector<8x128xf32> to vector<1x128xf32>
    %180 = vector.extract_strided_slice %174 {offsets = [5, 0], sizes = [1, 32], strides = [1, 1]} : vector<8x128xf32> to vector<1x32xf32>
    %181 = vector.extract_strided_slice %174 {offsets = [6, 0], sizes = [1, 32], strides = [1, 1]} : vector<8x128xf32> to vector<1x32xf32>
    %182 = vector.extract_strided_slice %174 {offsets = [7, 0], sizes = [1, 32], strides = [1, 1]} : vector<8x128xf32> to vector<1x32xf32>
    %183 = arith.truncf %164 : vector<48x32xf32> to vector<48x32xbf16>
    %cst_70 = arith.constant dense<0.000000e+00> : vector<48x96xf32>
    %184 = tpu.matmul %183, %166, %cst_70 {dimension_numbers = #tpu.dot_dimension_numbers<[1], [0], [0], [1], [0, 0, 1, 1], [], []>} : vector<48x32xbf16>, vector<32x96xbf16>, vector<48x96xf32> -> vector<48x96xf32>
    %185 = vector.broadcast %175 : vector<1x96xf32> to vector<48x96xf32>
    %186 = arith.addf %184, %185 : vector<48x96xf32>
    %187 = vector.extract_strided_slice %186 {offsets = [0, 0], sizes = [48, 32], strides = [1, 1]} : vector<48x96xf32> to vector<48x32xf32>
    %cst_71 = arith.constant 0.176776692 : f32
    %188 = vector.broadcast %cst_71 : f32 to vector<48x32xf32>
    %189 = arith.mulf %187, %188 : vector<48x32xf32>
    %190 = vector.extract_strided_slice %186 {offsets = [0, 32], sizes = [48, 32], strides = [1, 1]} : vector<48x96xf32> to vector<48x32xf32>
    %191 = vector.extract_strided_slice %186 {offsets = [0, 64], sizes = [48, 32], strides = [1, 1]} : vector<48x96xf32> to vector<48x32xf32>
    %192 = arith.truncf %189 : vector<48x32xf32> to vector<48x32xbf16>
    %193 = arith.truncf %190 : vector<48x32xf32> to vector<48x32xbf16>
    %cst_72 = arith.constant dense<0.000000e+00> : vector<48x48xf32>
    %194 = tpu.matmul %192, %193, %cst_72 {dimension_numbers = #tpu.dot_dimension_numbers<[1], [1], [0], [0], [0, 0, 1, 0], [], []>} : vector<48x32xbf16>, vector<48x32xbf16>, vector<48x48xf32> -> vector<48x48xf32>
    %195 = arith.addf %194, %60 : vector<48x48xf32>
    %cst_73 = arith.constant dense<0xFF800000> : vector<48xf32>
    %196 = vector.multi_reduction <maximumf>, %195, %cst_73 [1] : vector<48x48xf32> to vector<48xf32>
    %197 = vector.shape_cast %196 : vector<48xf32> to vector<48x1xf32>
    %198 = vector.broadcast %197 : vector<48x1xf32> to vector<48x48xf32>
    %199 = arith.subf %195, %198 : vector<48x48xf32>
    %200 = math.exp %199 : vector<48x48xf32>
    %cst_74 = arith.constant dense<0.000000e+00> : vector<48xf32>
    %201 = vector.multi_reduction <add>, %200, %cst_74 [1] : vector<48x48xf32> to vector<48xf32>
    %202 = vector.shape_cast %201 : vector<48xf32> to vector<48x1xf32>
    %203 = tpu.reciprocal %202 {approx = true} : vector<48x1xf32> -> vector<48x1xf32>
    %204 = vector.broadcast %203 : vector<48x1xf32> to vector<48x48xf32>
    %205 = arith.mulf %200, %204 : vector<48x48xf32>
    %206 = arith.truncf %205 : vector<48x48xf32> to vector<48x48xbf16>
    %207 = arith.truncf %191 : vector<48x32xf32> to vector<48x32xbf16>
    %cst_75 = arith.constant dense<0.000000e+00> : vector<48x32xf32>
    %208 = tpu.matmul %206, %207, %cst_75 {dimension_numbers = #tpu.dot_dimension_numbers<[1], [0], [0], [1], [0, 0, 1, 1], [], []>} : vector<48x48xbf16>, vector<48x32xbf16>, vector<48x32xf32> -> vector<48x32xf32>
    %209 = arith.truncf %208 : vector<48x32xf32> to vector<48x32xbf16>
    %cst_76 = arith.constant dense<0.000000e+00> : vector<48x32xf32>
    %210 = tpu.matmul %209, %168, %cst_76 {dimension_numbers = #tpu.dot_dimension_numbers<[1], [0], [0], [1], [0, 0, 1, 1], [], []>} : vector<48x32xbf16>, vector<32x32xbf16>, vector<48x32xf32> -> vector<48x32xf32>
    %211 = vector.broadcast %176 : vector<1x32xf32> to vector<48x32xf32>
    %212 = arith.addf %210, %211 : vector<48x32xf32>
    %213 = arith.addf %164, %212 : vector<48x32xf32>
    %cst_77 = arith.constant dense<0.000000e+00> : vector<48xf32>
    %214 = vector.multi_reduction <add>, %213, %cst_77 [1] : vector<48x32xf32> to vector<48xf32>
    %215 = vector.shape_cast %214 : vector<48xf32> to vector<48x1xf32>
    %cst_78 = arith.constant 3.200000e+01 : f32
    %216 = vector.broadcast %cst_78 : f32 to vector<48x1xf32>
    %217 = arith.divf %215, %216 : vector<48x1xf32>
    %218 = arith.mulf %213, %213 : vector<48x32xf32>
    %cst_79 = arith.constant dense<0.000000e+00> : vector<48xf32>
    %219 = vector.multi_reduction <add>, %218, %cst_79 [1] : vector<48x32xf32> to vector<48xf32>
    %220 = vector.shape_cast %219 : vector<48xf32> to vector<48x1xf32>
    %cst_80 = arith.constant 3.200000e+01 : f32
    %221 = vector.broadcast %cst_80 : f32 to vector<48x1xf32>
    %222 = arith.divf %220, %221 : vector<48x1xf32>
    %223 = vector.broadcast %217 : vector<48x1xf32> to vector<48x32xf32>
    %224 = arith.subf %213, %223 : vector<48x32xf32>
    %225 = arith.mulf %217, %217 : vector<48x1xf32>
    %226 = arith.subf %222, %225 : vector<48x1xf32>
    %cst_81 = arith.constant 9.99999974E-6 : f32
    %227 = vector.broadcast %cst_81 : f32 to vector<48x1xf32>
    %228 = arith.addf %226, %227 : vector<48x1xf32>
    %229 = math.rsqrt %228 : vector<48x1xf32>
    %230 = vector.broadcast %229 : vector<48x1xf32> to vector<48x32xf32>
    %231 = arith.mulf %224, %230 : vector<48x32xf32>
    %232 = vector.broadcast %177 : vector<1x32xf32> to vector<48x32xf32>
    %233 = arith.mulf %231, %232 : vector<48x32xf32>
    %234 = vector.broadcast %178 : vector<1x32xf32> to vector<48x32xf32>
    %235 = arith.addf %233, %234 : vector<48x32xf32>
    %236 = arith.truncf %235 : vector<48x32xf32> to vector<48x32xbf16>
    %cst_82 = arith.constant dense<0.000000e+00> : vector<48x128xf32>
    %237 = tpu.matmul %236, %170, %cst_82 {dimension_numbers = #tpu.dot_dimension_numbers<[1], [0], [0], [1], [0, 0, 1, 1], [], []>} : vector<48x32xbf16>, vector<32x128xbf16>, vector<48x128xf32> -> vector<48x128xf32>
    %238 = vector.broadcast %179 : vector<1x128xf32> to vector<48x128xf32>
    %239 = arith.addf %237, %238 : vector<48x128xf32>
    %cst_83 = arith.constant 0.000000e+00 : f32
    %240 = vector.broadcast %cst_83 : f32 to vector<48x128xf32>
    %241 = arith.maximumf %239, %240 : vector<48x128xf32>
    %242 = arith.truncf %241 : vector<48x128xf32> to vector<48x128xbf16>
    %cst_84 = arith.constant dense<0.000000e+00> : vector<48x32xf32>
    %243 = tpu.matmul %242, %172, %cst_84 {dimension_numbers = #tpu.dot_dimension_numbers<[1], [0], [0], [1], [0, 0, 1, 1], [], []>} : vector<48x128xbf16>, vector<128x32xbf16>, vector<48x32xf32> -> vector<48x32xf32>
    %244 = vector.broadcast %180 : vector<1x32xf32> to vector<48x32xf32>
    %245 = arith.addf %243, %244 : vector<48x32xf32>
    %246 = arith.addf %235, %245 : vector<48x32xf32>
    %cst_85 = arith.constant dense<0.000000e+00> : vector<48xf32>
    %247 = vector.multi_reduction <add>, %246, %cst_85 [1] : vector<48x32xf32> to vector<48xf32>
    %248 = vector.shape_cast %247 : vector<48xf32> to vector<48x1xf32>
    %cst_86 = arith.constant 3.200000e+01 : f32
    %249 = vector.broadcast %cst_86 : f32 to vector<48x1xf32>
    %250 = arith.divf %248, %249 : vector<48x1xf32>
    %251 = arith.mulf %246, %246 : vector<48x32xf32>
    %cst_87 = arith.constant dense<0.000000e+00> : vector<48xf32>
    %252 = vector.multi_reduction <add>, %251, %cst_87 [1] : vector<48x32xf32> to vector<48xf32>
    %253 = vector.shape_cast %252 : vector<48xf32> to vector<48x1xf32>
    %cst_88 = arith.constant 3.200000e+01 : f32
    %254 = vector.broadcast %cst_88 : f32 to vector<48x1xf32>
    %255 = arith.divf %253, %254 : vector<48x1xf32>
    %256 = vector.broadcast %250 : vector<48x1xf32> to vector<48x32xf32>
    %257 = arith.subf %246, %256 : vector<48x32xf32>
    %258 = arith.mulf %250, %250 : vector<48x1xf32>
    %259 = arith.subf %255, %258 : vector<48x1xf32>
    %cst_89 = arith.constant 9.99999974E-6 : f32
    %260 = vector.broadcast %cst_89 : f32 to vector<48x1xf32>
    %261 = arith.addf %259, %260 : vector<48x1xf32>
    %262 = math.rsqrt %261 : vector<48x1xf32>
    %263 = vector.broadcast %262 : vector<48x1xf32> to vector<48x32xf32>
    %264 = arith.mulf %257, %263 : vector<48x32xf32>
    %265 = vector.broadcast %181 : vector<1x32xf32> to vector<48x32xf32>
    %266 = arith.mulf %264, %265 : vector<48x32xf32>
    %267 = vector.broadcast %182 : vector<1x32xf32> to vector<48x32xf32>
    %268 = arith.addf %266, %267 : vector<48x32xf32>
    %c0_90 = arith.constant 0 : index
    %c0_91 = arith.constant 0 : index
    %269 = vector.load %arg9[%c0_90, %c0_91] : memref<2x32xf32, #tpu.memory_space<vmem>>, vector<1x32xf32>
    %c1_92 = arith.constant 1 : index
    %c0_93 = arith.constant 0 : index
    %270 = vector.load %arg9[%c1_92, %c0_93] : memref<2x32xf32, #tpu.memory_space<vmem>>, vector<1x1xf32>
    %271 = vector.broadcast %269 : vector<1x32xf32> to vector<48x32xf32>
    %272 = arith.mulf %268, %271 : vector<48x32xf32>
    %cst_94 = arith.constant dense<0.000000e+00> : vector<48xf32>
    %273 = vector.multi_reduction <add>, %272, %cst_94 [1] : vector<48x32xf32> to vector<48xf32>
    %274 = vector.shape_cast %273 : vector<48xf32> to vector<48x1xf32>
    %275 = vector.broadcast %270 : vector<1x1xf32> to vector<48x1xf32>
    %276 = arith.addf %274, %275 : vector<48x1xf32>
    %277 = math.tanh %276 : vector<48x1xf32>
    %c0_95 = arith.constant 0 : index
    %c0_96 = arith.constant 0 : index
    %278 = vector.load %arg10[%c0_95, %c0_96] : memref<48x1xf32, #tpu.memory_space<vmem>>, vector<48x1xf32>
    tpu.vector_store %arg10[%c0_95, %c0_96], %277 {strides = array<i32>} : memref<48x1xf32, #tpu.memory_space<vmem>>, vector<48x1xf32>,
    return
  }
}

</mosaic_0001>

<llo_original>
// kernel: gpdt_v2_forward.1
$region0: #{gpdt_v2_forward.1}
  #allocation0 [shape = 'u32[]', space=smem, size = 0x4, offset = 0x4, fixed_abs, tag = 'smem constant byte address 0x4 - core index']
  #allocation1 [shape = 'u32[72,128]{1,0:T(1,128)}', space=vmem, size = 0x9000, scoped, tag = 'internal scratch']
  %s0 = inlined_call_operand.vmem [shape: f32[48,32], index: 0, kind: input, shape index: {}]
  %s1 = inlined_call_operand.vmem [shape: s32[2], index: 1, kind: input, shape index: {}]
  %s2 = inlined_call_operand.vmem [shape: f32[8,24,48], index: 2, kind: input, shape index: {}]
  %s3 = inlined_call_operand.vmem [shape: f32[2,32], index: 3, kind: input, shape index: {}]
  %s4 = inlined_call_operand.vmem [shape: bf16[2,32,96], index: 4, kind: input, shape index: {}]
  %s5 = inlined_call_operand.vmem [shape: bf16[2,32,32], index: 5, kind: input, shape index: {}]
  %s6 = inlined_call_operand.vmem [shape: bf16[2,32,128], index: 6, kind: input, shape index: {}]
  %s7 = inlined_call_operand.vmem [shape: bf16[2,128,32], index: 7, kind: input, shape index: {}]
  %s8 = inlined_call_operand.vmem [shape: f32[2,8,128], index: 8, kind: input, shape index: {}]
  %s9 = inlined_call_operand.vmem [shape: f32[2,32], index: 9, kind: input, shape index: {}]
  %s10 = inlined_call_operand.vmem [shape: f32[48,1], index: 10, kind: output, shape index: {}]
  %s11 = sld [smem:[#allocation0]]
  $region54: #{gpdt_v2_forward.1} parent=0
    _
  %s13 = ssub.s32 1, %s11
  %s14 = scalar_select 0, %s13, %s11
  $region1: #{gpdt_v2_forward.1} parent=0
    #allocation2 [shape = 'u8[512]{0}', space=smem, size = 0x200, scoped, tag = 'input window, operand 1, single buffered']
    #allocation3 [shape = 's32[1]{0}', space=sflag, size = 0x4, scoped, tag = 'scoped memory for gpdt_v2_forward.1']
    %15 = vsyncpa [#allocation3], 0
    // Predicated region
    $region2: #{gpdt_v2_forward.1} parent=1 // pred_check
      _
    $region3: #{gpdt_v2_forward.1} parent=1 // pred_check_branch
      %17 = sbr.rel (0) target = $region5
    $region4: #{gpdt_v2_forward.1} parent=1 // pred_region
      _
    $region5: #{gpdt_v2_forward.1} parent=1 // pred_fallthru
      _
    // Predicated region
    $region6: #{gpdt_v2_forward.1} parent=1 // pred_check
      _
    $region7: #{gpdt_v2_forward.1} parent=1 // pred_check_branch
      %19 = sbr.rel (0) target = $region9
    $region8: #{gpdt_v2_forward.1} parent=1 // pred_region
      %21 = vsyncadd [#allocation3], 0
      %s23 = sshll.u32 %s1, 4
      %s24 = int_to_ptr.vmem [resolvable:$true] %s23
      %26 = dma.vmem_to_smem %s24, 16, [#allocation2], [#allocation3]
    $region9: #{gpdt_v2_forward.1} parent=1 // pred_fallthru
      _
    // Predicated region
    $region10: #{gpdt_v2_forward.1} parent=1 // pred_check
      _
    $region11: #{gpdt_v2_forward.1} parent=1 // pred_check_branch
      %28 = sbr.rel (0) target = $region13
    $region12: #{gpdt_v2_forward.1} parent=1 // pred_region
      _
    $region13: #{gpdt_v2_forward.1} parent=1 // pred_fallthru
      _
    // Predicated region
    $region14: #{gpdt_v2_forward.1} parent=1 // pred_check
      _
    $region15: #{gpdt_v2_forward.1} parent=1 // pred_check_branch
      %30 = sbr.rel (0) target = $region17
    $region16: #{gpdt_v2_forward.1} parent=1 // pred_region
      _
    $region17: #{gpdt_v2_forward.1} parent=1 // pred_fallthru
      _
    // Predicated region
    $region18: #{gpdt_v2_forward.1} parent=1 // pred_check
      _
    $region19: #{gpdt_v2_forward.1} parent=1 // pred_check_branch
      %32 = sbr.rel (0) target = $region21
    $region20: #{gpdt_v2_forward.1} parent=1 // pred_region
      _
    $region21: #{gpdt_v2_forward.1} parent=1 // pred_fallthru
      _
    // Predicated region
    $region22: #{gpdt_v2_forward.1} parent=1 // pred_check
      _
    $region23: #{gpdt_v2_forward.1} parent=1 // pred_check_branch
      %34 = sbr.rel (0) target = $region25
    $region24: #{gpdt_v2_forward.1} parent=1 // pred_region
      _
    $region25: #{gpdt_v2_forward.1} parent=1 // pred_fallthru
      _
    // Predicated region
    $region26: #{gpdt_v2_forward.1} parent=1 // pred_check
      _
    $region27: #{gpdt_v2_forward.1} parent=1 // pred_check_branch
      %36 = sbr.rel (0) target = $region29
    $region28: #{gpdt_v2_forward.1} parent=1 // pred_region
      _
    $region29: #{gpdt_v2_forward.1} parent=1 // pred_fallthru
      _
    // Predicated region
    $region30: #{gpdt_v2_forward.1} parent=1 // pred_check
      _
    $region31: #{gpdt_v2_forward.1} parent=1 // pred_check_branch
      %38 = sbr.rel (0) target = $region33
    $region32: #{gpdt_v2_forward.1} parent=1 // pred_region
      _
    $region33: #{gpdt_v2_forward.1} parent=1 // pred_fallthru
      _
    // Predicated region
    $region34: #{gpdt_v2_forward.1} parent=1 // pred_check
      _
    $region35: #{gpdt_v2_forward.1} parent=1 // pred_check_branch
      %40 = sbr.rel (0) target = $region37
    $region36: #{gpdt_v2_forward.1} parent=1 // pred_region
      _
    $region37: #{gpdt_v2_forward.1} parent=1 // pred_fallthru
      _
    // Predicated region
    $region38: #{gpdt_v2_forward.1} parent=1 // pred_check
      _
    $region39: #{gpdt_v2_forward.1} parent=1 // pred_check_branch
      %42 = sbr.rel (0) target = $region41
    $region40: #{gpdt_v2_forward.1} parent=1 // pred_region
      _
    $region41: #{gpdt_v2_forward.1} parent=1 // pred_fallthru
      _
    // Predicated region
    $region42: #{gpdt_v2_forward.1} parent=1 // pred_check
      _
    $region43: #{gpdt_v2_forward.1} parent=1 // pred_check_branch
      %44 = sbr.rel (0) target = $region45
    $region44: #{gpdt_v2_forward.1} parent=1 // pred_region
      %46 = dma.done [#allocation3], 16
    $region45: #{gpdt_v2_forward.1} parent=1 // pred_fallthru
      _
    %47 = sfence
    %v49 = vld [vmem:[%s0] sm:$0xff]
    %v50 = vld [vmem:[%s0 + $0x8] sm:$0xff]
    %v51 = vld [vmem:[%s0 + $0x10] sm:$0xff]
    %v52 = vld [vmem:[%s0 + $0x18] sm:$0xff]
    %v53 = vld [vmem:[%s0 + $0x20] sm:$0xff]
    %v54 = vld [vmem:[%s0 + $0x28] sm:$0xff]
    %v55 = vld [vmem:[%s3] sm:$0x1]
    %v56 = vld [vmem:[%s3 + $0x1] sm:$0x1]
    %vm57 = vcmask 261120
    %v58 = vsel %vm57, %v49, 0.0
    %59 = vadd.xlane.f32.xlu0 %v58
    %v60 = vpop.xlane.xlu0 %59
    %v61 = vsel %vm57, %v50, 0.0
    %62 = vadd.xlane.f32.xlu0 %v61
    %v63 = vpop.xlane.xlu0 %62
    %v64 = vsel %vm57, %v51, 0.0
    %65 = vadd.xlane.f32.xlu0 %v64
    %v66 = vpop.xlane.xlu0 %65
    %v67 = vsel %vm57, %v52, 0.0
    %68 = vadd.xlane.f32.xlu0 %v67
    %v69 = vpop.xlane.xlu0 %68
    %v70 = vsel %vm57, %v53, 0.0
    %71 = vadd.xlane.f32.xlu0 %v70
    %v72 = vpop.xlane.xlu0 %71
    %v73 = vsel %vm57, %v54, 0.0
    %74 = vadd.xlane.f32.xlu0 %v73
    %v75 = vpop.xlane.xlu0 %74
    %v76 = vrcp.pop 32.0
    %v77 = vmul.f32 32.0, %v76
    %v78 = vsub.f32 1.0, %v77
    %v79 = vmul.f32 %v76, %v78
    %v80 = vadd.f32 %v76, %v79
    %vm81 = vweird.f32 %v76
    %v82 = vsel %vm81, %v76, %v80
    %v83 = vmul.f32 %v60, %v82
    %v84 = vmul.f32 %v63, %v82
    %v85 = vmul.f32 %v66, %v82
    %v86 = vmul.f32 %v69, %v82
    %v87 = vmul.f32 %v72, %v82
    %v88 = vmul.f32 %v75, %v82
    %v89 = vmul.f32 %v49, %v49
    %v90 = vmul.f32 %v50, %v50
    %v91 = vmul.f32 %v51, %v51
    %v92 = vmul.f32 %v52, %v52
    %v93 = vmul.f32 %v53, %v53
    %v94 = vmul.f32 %v54, %v54
    %v95 = vsel %vm57, %v89, 0.0
    %96 = vadd.xlane.f32.xlu0 %v95
    %v97 = vpop.xlane.xlu0 %96
    %v98 = vsel %vm57, %v90, 0.0
    %99 = vadd.xlane.f32.xlu0 %v98
    %v100 = vpop.xlane.xlu0 %99
    %v101 = vsel %vm57, %v91, 0.0
    %102 = vadd.xlane.f32.xlu0 %v101
    %v103 = vpop.xlane.xlu0 %102
    %v104 = vsel %vm57, %v92, 0.0
    %105 = vadd.xlane.f32.xlu0 %v104
    %v106 = vpop.xlane.xlu0 %105
    %v107 = vsel %vm57, %v93, 0.0
    %108 = vadd.xlane.f32.xlu0 %v107
    %v109 = vpop.xlane.xlu0 %108
    %v110 = vsel %vm57, %v94, 0.0
    %111 = vadd.xlane.f32.xlu0 %v110
    %v112 = vpop.xlane.xlu0 %111
    %v113 = vmul.f32 %v97, %v82
    %v114 = vmul.f32 %v100, %v82
    %v115 = vmul.f32 %v103, %v82
    %v116 = vmul.f32 %v106, %v82
    %v117 = vmul.f32 %v109, %v82
    %v118 = vmul.f32 %v112, %v82
    %v119 = vsub.f32 %v49, %v83
    %v120 = vsub.f32 %v50, %v84
    %v121 = vsub.f32 %v51, %v85
    %v122 = vsub.f32 %v52, %v86
    %v123 = vsub.f32 %v53, %v87
    %v124 = vsub.f32 %v54, %v88
    %v125 = vmul.f32 %v83, %v83
    %v126 = vmul.f32 %v84, %v84
    %v127 = vmul.f32 %v85, %v85
    %v128 = vmul.f32 %v86, %v86
    %v129 = vmul.f32 %v87, %v87
    %v130 = vmul.f32 %v88, %v88
    %v131 = vsub.f32 %v113, %v125
    %v132 = vsub.f32 %v114, %v126
    %v133 = vsub.f32 %v115, %v127
    %v134 = vsub.f32 %v116, %v128
    %v135 = vsub.f32 %v117, %v129
    %v136 = vsub.f32 %v118, %v130
    %v137 = vadd.f32 %v131, 1e-05
    %v138 = vadd.f32 %v132, 1e-05
    %v139 = vadd.f32 %v133, 1e-05
    %v140 = vadd.f32 %v134, 1e-05
    %v141 = vadd.f32 %v135, 1e-05
    %v142 = vadd.f32 %v136, 1e-05
    %v143 = vrsqrt.pop %v137
    %v144 = vmul.f32 %v143, %v137
    %v145 = vmul.f32 %v144, %v143
    %v146 = vmul.f32 0.5, %v145
    %v147 = vsub.f32 1.5, %v146
    %v148 = vmul.f32 %v143, %v147
    %vm149 = vweird.f32 %v137
    %vm150 = vweird.f32 %v143
    %vm151 = vmor %vm149, %vm150
    %v152 = vsel %vm151, %v143, %v148
    %v153 = vrsqrt.pop %v138
    %v154 = vmul.f32 %v153, %v138
    %v155 = vmul.f32 %v154, %v153
    %v156 = vmul.f32 0.5, %v155
    %v157 = vsub.f32 1.5, %v156
    %v158 = vmul.f32 %v153, %v157
    %vm159 = vweird.f32 %v138
    %vm160 = vweird.f32 %v153
    %vm161 = vmor %vm159, %vm160
    %v162 = vsel %vm161, %v153, %v158
    %v163 = vrsqrt.pop %v139
    %v164 = vmul.f32 %v163, %v139
    %v165 = vmul.f32 %v164, %v163
    %v166 = vmul.f32 0.5, %v165
    %v167 = vsub.f32 1.5, %v166
    %v168 = vmul.f32 %v163, %v167
    %vm169 = vweird.f32 %v139
    %vm170 = vweird.f32 %v163
    %vm171 = vmor %vm169, %vm170
    %v172 = vsel %vm171, %v163, %v168
    %v173 = vrsqrt.pop %v140
    %v174 = vmul.f32 %v173, %v140
    %v175 = vmul.f32 %v174, %v173
    %v176 = vmul.f32 0.5, %v175
    %v177 = vsub.f32 1.5, %v176
    %v178 = vmul.f32 %v173, %v177
    %vm179 = vweird.f32 %v140
    %vm180 = vweird.f32 %v173
    %vm181 = vmor %vm179, %vm180
    %v182 = vsel %vm181, %v173, %v178
    %v183 = vrsqrt.pop %v141
    %v184 = vmul.f32 %v183, %v141
    %v185 = vmul.f32 %v184, %v183
    %v186 = vmul.f32 0.5, %v185
    %v187 = vsub.f32 1.5, %v186
    %v188 = vmul.f32 %v183, %v187
    %vm189 = vweird.f32 %v141
    %vm190 = vweird.f32 %v183
    %vm191 = vmor %vm189, %vm190
    %v192 = vsel %vm191, %v183, %v188
    %v193 = vrsqrt.pop %v142
    %v194 = vmul.f32 %v193, %v142
    %v195 = vmul.f32 %v194, %v193
    %v196 = vmul.f32 0.5, %v195
    %v197 = vsub.f32 1.5, %v196
    %v198 = vmul.f32 %v193, %v197
    %vm199 = vweird.f32 %v142
    %vm200 = vweird.f32 %v193
    %vm201 = vmor %vm199, %vm200
    %v202 = vsel %vm201, %v193, %v198
    %v203 = vmul.f32 %v119, %v152
    %v204 = vmul.f32 %v120, %v162
    %v205 = vmul.f32 %v121, %v172
    %v206 = vmul.f32 %v122, %v182
    %v207 = vmul.f32 %v123, %v192
    %v208 = vmul.f32 %v124, %v202
    %v209 = vperm.slane %v55, 0
    %v210 = vmul.f32 %v203, %v209
    %v211 = vmul.f32 %v204, %v209
    %v212 = vmul.f32 %v205, %v209
    %v213 = vmul.f32 %v206, %v209
    %v214 = vmul.f32 %v207, %v209
    %v215 = vmul.f32 %v208, %v209
    %v216 = vperm.slane %v56, 0
    %v217 = vadd.f32 %v210, %v216
    %v218 = vadd.f32 %v211, %v216
    %v219 = vadd.f32 %v212, %v216
    %v220 = vadd.f32 %v213, %v216
    %v221 = vadd.f32 %v214, %v216
    %v222 = vadd.f32 %v215, %v216
    %s223 = sld [smem:[#allocation2]]
    %s224 = smul.u32 %s223, 24
    %s225 = scalar_lea.vmem %s2, %s224
    %v226 = vld [vmem:[%s225] sm:$0xff]
    %v227 = vld [vmem:[%s225 + $0x8] sm:$0xff]
    %v228 = vld [vmem:[%s225 + $0x10] sm:$0xff]
    %s229 = sld [smem:[#allocation2 + $0x1]]
    %s230 = smul.u32 %s229, 24
    %s231 = scalar_lea.vmem %s2, %s230
    %v232 = vld [vmem:[%s231] sm:$0xff]
    %v233 = vld [vmem:[%s231 + $0x8] sm:$0xff]
    %v234 = vld [vmem:[%s231 + $0x10] sm:$0xff]
    %v235 = vlaneseq
    %v236 = vshrl.u32 %v235, 7
    %v237 = vadd.s32 %v236, 8
    %v238 = vadd.s32 %v236, 16
    %v239 = vadd.s32 %v236, 24
    %v240 = vadd.s32 %v236, 32
    %v241 = vadd.s32 %v236, 40
    %v242 = vlaneseq
    %v243 = vand.u32 %v242, 127
    %vm244 = vcmp.ge.s32.totalorder %v236, 0
    %vm245 = vcmp.ge.s32.totalorder %v237, 0
    %vm246 = vcmp.ge.s32.totalorder %v238, 0
    %vm247 = vcmp.ge.s32.totalorder %v239, 0
    %vm248 = vcmp.ge.s32.totalorder %v240, 0
    %vm249 = vcmp.ge.s32.totalorder %v241, 0
    %vm250 = vcmp.lt.s32.totalorder %v236, 24
    %vm251 = vcmp.lt.s32.totalorder %v237, 24
    %vm252 = vcmp.lt.s32.totalorder %v238, 24
    %vm253 = vcmp.lt.s32.totalorder %v239, 24
    %vm254 = vcmp.lt.s32.totalorder %v240, 24
    %vm255 = vcmp.lt.s32.totalorder %v241, 24
    %vm256 = vmand %vm244, %vm250
    %vm257 = vmand %vm245, %vm251
    %vm258 = vmand %vm246, %vm252
    %vm259 = vmand %vm247, %vm253
    %vm260 = vmand %vm248, %vm254
    %vm261 = vmand %vm249, %vm255
    %vm262 = vcmp.ge.s32.totalorder %v243, 0
    %vm263 = vmand %vm256, %vm262
    %vm264 = vmand %vm257, %vm262
    %vm265 = vmand %vm258, %vm262
    %vm266 = vmand %vm259, %vm262
    %vm267 = vmand %vm260, %vm262
    %vm268 = vmand %vm261, %vm262
    %vm269 = vcmp.lt.s32.totalorder %v243, 24
    %vm270 = vmand %vm263, %vm269
    %vm271 = vmand %vm264, %vm269
    %vm272 = vmand %vm265, %vm269
    %vm273 = vmand %vm266, %vm269
    %vm274 = vmand %vm267, %vm269
    %vm275 = vmand %vm268, %vm269
    %vm276 = vcmp.ge.s32.totalorder %v236, 24
    %vm277 = vcmp.ge.s32.totalorder %v237, 24
    %vm278 = vcmp.ge.s32.totalorder %v238, 24
    %vm279 = vcmp.ge.s32.totalorder %v239, 24
    %vm280 = vcmp.ge.s32.totalorder %v240, 24
    %vm281 = vcmp.ge.s32.totalorder %v241, 24
    %vm282 = vcmp.lt.s32.totalorder %v236, 48
    %vm283 = vcmp.lt.s32.totalorder %v237, 48
    %vm284 = vcmp.lt.s32.totalorder %v238, 48
    %vm285 = vcmp.lt.s32.totalorder %v239, 48
    %vm286 = vcmp.lt.s32.totalorder %v240, 48
    %vm287 = vcmp.lt.s32.totalorder %v241, 48
    %vm288 = vmand %vm276, %vm282
    %vm289 = vmand %vm277, %vm283
    %vm290 = vmand %vm278, %vm284
    %vm291 = vmand %vm279, %vm285
    %vm292 = vmand %vm280, %vm286
    %vm293 = vmand %vm281, %vm287
    %vm294 = vcmp.ge.s32.totalorder %v243, 24
    %vm295 = vmand %vm288, %vm294
    %vm296 = vmand %vm289, %vm294
    %vm297 = vmand %vm290, %vm294
    %vm298 = vmand %vm291, %vm294
    %vm299 = vmand %vm292, %vm294
    %vm300 = vmand %vm293, %vm294
    %vm301 = vcmp.lt.s32.totalorder %v243, 48
    %vm302 = vmand %vm295, %vm301
    %vm303 = vmand %vm296, %vm301
    %vm304 = vmand %vm297, %vm301
    %vm305 = vmand %vm298, %vm301
    %vm306 = vmand %vm299, %vm301
    %vm307 = vmand %vm300, %vm301
    %vm308 = vmor %vm270, %vm302
    %vm309 = vmor %vm271, %vm303
    %vm310 = vmor %vm272, %vm304
    %vm311 = vmor %vm273, %vm305
    %vm312 = vmor %vm274, %vm306
    %vm313 = vmor %vm275, %vm307
    %v314 = vsel %vm308, %v226, -1e+09
    %v315 = vsel %vm309, %v227, -1e+09
    %v316 = vsel %vm310, %v228, -1e+09
    %v317 = vsel %vm311, %v232, -1e+09
    %v318 = vsel %vm312, %v233, -1e+09
    %v319 = vsel %vm313, %v234, -1e+09
    %v320 = vld [vmem:[%s4] sm:$0xf]
    %v321 = vld [vmem:[%s4 + $0x4] sm:$0xf]
    %v322 = vld [vmem:[%s4 + $0x8] sm:$0xf]
    %v323 = vld [vmem:[%s4 + $0xc] sm:$0xf]
    %v324 = vld [vmem:[%s5] sm:$0xf]
    %v325 = vld [vmem:[%s5 + $0x4] sm:$0xf]
    %v326 = vld [vmem:[%s5 + $0x8] sm:$0xf]
    %v327 = vld [vmem:[%s5 + $0xc] sm:$0xf]
    %v328 = vld [vmem:[%s6] sm:$0xf]
    %v329 = vld [vmem:[%s6 + $0x4] sm:$0xf]
    %v330 = vld [vmem:[%s6 + $0x8] sm:$0xf]
    %v331 = vld [vmem:[%s6 + $0xc] sm:$0xf]
    %v332 = vld [vmem:[%s7] sm:$0xf]
    %v333 = vld [vmem:[%s7 + $0x4] sm:$0xf]
    %v334 = vld [vmem:[%s7 + $0x8] sm:$0xf]
    %v335 = vld [vmem:[%s7 + $0xc] sm:$0xf]
    %v336 = vld [vmem:[%s7 + $0x10] sm:$0xf]
    %v337 = vld [vmem:[%s7 + $0x14] sm:$0xf]
    %v338 = vld [vmem:[%s7 + $0x18] sm:$0xf]
    %v339 = vld [vmem:[%s7 + $0x1c] sm:$0xf]
    %v340 = vld [vmem:[%s7 + $0x20] sm:$0xf]
    %v341 = vld [vmem:[%s7 + $0x24] sm:$0xf]
    %v342 = vld [vmem:[%s7 + $0x28] sm:$0xf]
    %v343 = vld [vmem:[%s7 + $0x2c] sm:$0xf]
    %v344 = vld [vmem:[%s7 + $0x30] sm:$0xf]
    %v345 = vld [vmem:[%s7 + $0x34] sm:$0xf]
    %v346 = vld [vmem:[%s7 + $0x38] sm:$0xf]
    %v347 = vld [vmem:[%s7 + $0x3c] sm:$0xf]
    %v348 = vld [vmem:[%s8] sm:$0xff]
    %v349 = vpack.c.bf16 %v218, %v217
    %v350 = vpack.c.bf16 %v220, %v219
    %v351 = vpack.c.bf16 %v222, %v221
    %v352 = vperm.slane %v348, 0
    %v357 = vunpack.c.l.b16 %v320
    %v358 = vunpack.c.l.b16 %v321
    %v359 = vunpack.c.l.b16 %v322
    %v360 = vunpack.c.l.b16 %v323
    %v361 = vpack.c.b16 %v358, %v357
    %v362 = vpack.c.b16 %v360, %v359
    %v366 = vsel %vm57, %v349, 0
    %v369 = vsel %vm57, %v350, 0
    %v372 = vsel %vm57, %v351, 0
    %374 = vmatpush.bf16.msra.mxu0 0
    %375 = vmatpush.bf16.msra.mxu0 0
    %376 = vmatpush.bf16.msra.mxu0 0
    %377 = vmatpush.bf16.msra.mxu0 0
    %378 = vmatpush.bf16.msra.mxu0 0
    %379 = vmatpush.bf16.msra.mxu0 0
    %380 = vmatpush.bf16.msra.mxu0 %v362
    %381 = vmatpush.bf16.msra.mxu0 %v361
    %382 = vmatmul.bf16.gmra.mxu0 %v366
    %v383 = vpop.f32.mrf.mxu0
    %v384 = vadd.f32 %v352, %v383
    %v385 = vpop.f32.mrf.mxu0
    %v386 = vadd.f32 %v352, %v385
    %387 = vmatmul.bf16.gmra.mxu0 %v369
    %v388 = vpop.f32.mrf.mxu0
    %v389 = vadd.f32 %v352, %v388
    %v390 = vpop.f32.mrf.mxu0
    %v391 = vadd.f32 %v352, %v390
    %392 = vmatmul.bf16.gmra.mxu0 %v372
    %v393 = vpop.f32.mrf.mxu0
    %v394 = vadd.f32 %v352, %v393
    %v395 = vpop.f32.mrf.mxu0
    %v396 = vadd.f32 %v352, %v395
    %397 = vdwg.mxu0
    %v398 = vmul.f32 %v384, 0.17677669
    %v399 = vmul.f32 %v386, 0.17677669
    %v400 = vmul.f32 %v389, 0.17677669
    %v401 = vmul.f32 %v391, 0.17677669
    %v402 = vmul.f32 %v394, 0.17677669
    %v403 = vmul.f32 %v396, 0.17677669
    %v404 = vpack.c.bf16 %v399, %v398
    %v405 = vpack.c.bf16 %v401, %v400
    %v406 = vpack.c.bf16 %v403, %v402
    %v407 = vpack.c.bf16 %v386, %v384
    %v408 = vpack.c.bf16 %v391, %v389
    %v409 = vpack.c.bf16 %v396, %v394
    %413 = vrot.lane.b32.xlu0 %v407, 96
    %v414 = vpop.permute.xlu0 %413
    %415 = vrot.lane.b32.xlu0 %v408, 96
    %v416 = vpop.permute.xlu0 %415
    %417 = vrot.lane.b32.xlu0 %v409, 96
    %v418 = vpop.permute.xlu0 %417
    %v420 = vsel %vm57, %v404, 0
    %v423 = vsel %vm57, %v405, 0
    %v426 = vsel %vm57, %v406, 0
    %v429 = vsel %vm57, %v414, 0
    %v432 = vsel %vm57, %v416, 0
    %v435 = vsel %vm57, %v418, 0
    %437 = vmatpush.bf16.xpose.msra.mxu0 0
    %438 = vmatpush.bf16.xpose.msra.mxu0 0
    %439 = vmatpush.bf16.xpose.msra.mxu0 0
    %440 = vmatpush.bf16.xpose.msra.mxu0 0
    %441 = vmatpush.bf16.xpose.msra.mxu0 0
    %442 = vmatpush.bf16.xpose.msra.mxu0 %v435
    %443 = vmatpush.bf16.xpose.msra.mxu0 %v432
    %444 = vmatpush.bf16.xpose.msra.mxu0 %v429
    %445 = vmatmul.bf16.gmra.mxu0 %v420
    %v446 = vpop.f32.mrf.mxu0
    %v447 = vadd.f32 %v314, %v446
    %v448 = vpop.f32.mrf.mxu0
    %v449 = vadd.f32 %v315, %v448
    %450 = vmatmul.bf16.gmra.mxu0 %v423
    %v451 = vpop.f32.mrf.mxu0
    %v452 = vadd.f32 %v316, %v451
    %v453 = vpop.f32.mrf.mxu0
    %v454 = vadd.f32 %v317, %v453
    %455 = vmatmul.bf16.gmra.mxu0 %v426
    %v456 = vpop.f32.mrf.mxu0
    %v457 = vadd.f32 %v318, %v456
    %v458 = vpop.f32.mrf.mxu0
    %v459 = vadd.f32 %v319, %v458
    %460 = vdwg.mxu0
    %vm461 = vcmask 392192
    %v462 = vsel %vm461, %v447, -inf
    %463 = vmax.xlane.f32.xlu0 %v462
    %v464 = vpop.xlane.xlu0 %463
    %v465 = vsel %vm461, %v449, -inf
    %466 = vmax.xlane.f32.xlu0 %v465
    %v467 = vpop.xlane.xlu0 %466
    %v468 = vsel %vm461, %v452, -inf
    %469 = vmax.xlane.f32.xlu0 %v468
    %v470 = vpop.xlane.xlu0 %469
    %v471 = vsel %vm461, %v454, -inf
    %472 = vmax.xlane.f32.xlu0 %v471
    %v473 = vpop.xlane.xlu0 %472
    %v474 = vsel %vm461, %v457, -inf
    %475 = vmax.xlane.f32.xlu0 %v474
    %v476 = vpop.xlane.xlu0 %475
    %v477 = vsel %vm461, %v459, -inf
    %478 = vmax.xlane.f32.xlu0 %v477
    %v479 = vpop.xlane.xlu0 %478
    %v480 = vsub.f32 %v447, %v464
    %v481 = vsub.f32 %v449, %v467
    %v482 = vsub.f32 %v452, %v470
    %v483 = vsub.f32 %v454, %v473
    %v484 = vsub.f32 %v457, %v476
    %v485 = vsub.f32 %v459, %v479
    %v486 = vmul.f32 %v480, 1.442695
    %v487 = vpow.pop %v486
    %v488 = vmul.f32 %v481, 1.442695
    %v489 = vpow.pop %v488
    %v490 = vmul.f32 %v482, 1.442695
    %v491 = vpow.pop %v490
    %v492 = vmul.f32 %v483, 1.442695
    %v493 = vpow.pop %v492
    %v494 = vmul.f32 %v484, 1.442695
    %v495 = vpow.pop %v494
    %v496 = vmul.f32 %v485, 1.442695
    %v497 = vpow.pop %v496
    %v498 = vsel %vm461, %v487, 0.0
    %499 = vadd.xlane.f32.xlu0 %v498
    %v500 = vpop.xlane.xlu0 %499
    %v501 = vsel %vm461, %v489, 0.0
    %502 = vadd.xlane.f32.xlu0 %v501
    %v503 = vpop.xlane.xlu0 %502
    %v504 = vsel %vm461, %v491, 0.0
    %505 = vadd.xlane.f32.xlu0 %v504
    %v506 = vpop.xlane.xlu0 %505
    %v507 = vsel %vm461, %v493, 0.0
    %508 = vadd.xlane.f32.xlu0 %v507
    %v509 = vpop.xlane.xlu0 %508
    %v510 = vsel %vm461, %v495, 0.0
    %511 = vadd.xlane.f32.xlu0 %v510
    %v512 = vpop.xlane.xlu0 %511
    %v513 = vsel %vm461, %v497, 0.0
    %514 = vadd.xlane.f32.xlu0 %v513
    %v515 = vpop.xlane.xlu0 %514
    %v516 = vrcp.pop %v500
    %v517 = vrcp.pop %v503
    %v518 = vrcp.pop %v506
    %v519 = vrcp.pop %v509
    %v520 = vrcp.pop %v512
    %v521 = vrcp.pop %v515
    %v522 = vmul.f32 %v487, %v516
    %v523 = vmul.f32 %v489, %v517
    %v524 = vmul.f32 %v491, %v518
    %v525 = vmul.f32 %v493, %v519
    %v526 = vmul.f32 %v495, %v520
    %v527 = vmul.f32 %v497, %v521
    %v528 = vpack.c.bf16 %v523, %v522
    %v529 = vpack.c.bf16 %v525, %v524
    %v530 = vpack.c.bf16 %v527, %v526
    %531 = vrot.lane.b32.xlu0 %v407, 64
    %v532 = vpop.permute.xlu0 %531
    %533 = vrot.lane.b32.xlu0 %v408, 64
    %v534 = vpop.permute.xlu0 %533
    %535 = vrot.lane.b32.xlu0 %v409, 64
    %v536 = vpop.permute.xlu0 %535
    %v541 = vsel %vm461, %v528, 0
    %v544 = vsel %vm461, %v529, 0
    %v547 = vsel %vm461, %v530, 0
    %549 = vmatpush.bf16.msra.mxu0 0
    %550 = vmatpush.bf16.msra.mxu0 0
    %551 = vmatpush.bf16.msra.mxu0 0
    %552 = vmatpush.bf16.msra.mxu0 0
    %553 = vmatpush.bf16.msra.mxu0 0
    %554 = vmatpush.bf16.msra.mxu0 %v536
    %555 = vmatpush.bf16.msra.mxu0 %v534
    %556 = vmatpush.bf16.msra.mxu0 %v532
    %557 = vmatmul.bf16.gmra.mxu0 %v541
    %v558 = vpop.f32.mrf.mxu0
    %v559 = vadd.f32 0.0, %v558
    %v560 = vpop.f32.mrf.mxu0
    %v561 = vadd.f32 0.0, %v560
    %562 = vmatmul.bf16.gmra.mxu0 %v544
    %v563 = vpop.f32.mrf.mxu0
    %v564 = vadd.f32 0.0, %v563
    %v565 = vpop.f32.mrf.mxu0
    %v566 = vadd.f32 0.0, %v565
    %567 = vmatmul.bf16.gmra.mxu0 %v547
    %v568 = vpop.f32.mrf.mxu0
    %v569 = vadd.f32 0.0, %v568
    %v570 = vpop.f32.mrf.mxu0
    %v571 = vadd.f32 0.0, %v570
    %572 = vdwg.mxu0
    %v573 = vpack.c.bf16 %v561, %v559
    %v574 = vpack.c.bf16 %v566, %v564
    %v575 = vpack.c.bf16 %v571, %v569
    %v576 = vperm.slane %v348, 1
    %v581 = vunpack.c.l.b16 %v324
    %v582 = vunpack.c.l.b16 %v325
    %v583 = vunpack.c.l.b16 %v326
    %v584 = vunpack.c.l.b16 %v327
    %v585 = vpack.c.b16 %v582, %v581
    %v586 = vpack.c.b16 %v584, %v583
    %v590 = vsel %vm57, %v573, 0
    %v593 = vsel %vm57, %v574, 0
    %v596 = vsel %vm57, %v575, 0
    %598 = vmatpush.bf16.msra.mxu0 0
    %599 = vmatpush.bf16.msra.mxu0 0
    %600 = vmatpush.bf16.msra.mxu0 0
    %601 = vmatpush.bf16.msra.mxu0 0
    %602 = vmatpush.bf16.msra.mxu0 0
    %603 = vmatpush.bf16.msra.mxu0 0
    %604 = vmatpush.bf16.msra.mxu0 %v586
    %605 = vmatpush.bf16.msra.mxu0 %v585
    %606 = vmatmul.bf16.gmra.mxu0 %v590
    %v607 = vpop.f32.mrf.mxu0
    %v608 = vadd.f32 %v576, %v607
    %v609 = vpop.f32.mrf.mxu0
    %v610 = vadd.f32 %v576, %v609
    %611 = vmatmul.bf16.gmra.mxu0 %v593
    %v612 = vpop.f32.mrf.mxu0
    %v613 = vadd.f32 %v576, %v612
    %v614 = vpop.f32.mrf.mxu0
    %v615 = vadd.f32 %v576, %v614
    %616 = vmatmul.bf16.gmra.mxu0 %v596
    %v617 = vpop.f32.mrf.mxu0
    %v618 = vadd.f32 %v576, %v617
    %v619 = vpop.f32.mrf.mxu0
    %v620 = vadd.f32 %v576, %v619
    %621 = vdwg.mxu0
    %v622 = vadd.f32 %v217, %v608
    %v623 = vadd.f32 %v218, %v610
    %v624 = vadd.f32 %v219, %v613
    %v625 = vadd.f32 %v220, %v615
    %v626 = vadd.f32 %v221, %v618
    %v627 = vadd.f32 %v222, %v620
    %v628 = vsel %vm57, %v622, 0.0
    %629 = vadd.xlane.f32.xlu0 %v628
    %v630 = vpop.xlane.xlu0 %629
    %v631 = vsel %vm57, %v623, 0.0
    %632 = vadd.xlane.f32.xlu0 %v631
    %v633 = vpop.xlane.xlu0 %632
    %v634 = vsel %vm57, %v624, 0.0
    %635 = vadd.xlane.f32.xlu0 %v634
    %v636 = vpop.xlane.xlu0 %635
    %v637 = vsel %vm57, %v625, 0.0
    %638 = vadd.xlane.f32.xlu0 %v637
    %v639 = vpop.xlane.xlu0 %638
    %v640 = vsel %vm57, %v626, 0.0
    %641 = vadd.xlane.f32.xlu0 %v640
    %v642 = vpop.xlane.xlu0 %641
    %v643 = vsel %vm57, %v627, 0.0
    %644 = vadd.xlane.f32.xlu0 %v643
    %v645 = vpop.xlane.xlu0 %644
    %v646 = vmul.f32 %v630, %v82
    %v647 = vmul.f32 %v633, %v82
    %v648 = vmul.f32 %v636, %v82
    %v649 = vmul.f32 %v639, %v82
    %v650 = vmul.f32 %v642, %v82
    %v651 = vmul.f32 %v645, %v82
    %v652 = vmul.f32 %v622, %v622
    %v653 = vmul.f32 %v623, %v623
    %v654 = vmul.f32 %v624, %v624
    %v655 = vmul.f32 %v625, %v625
    %v656 = vmul.f32 %v626, %v626
    %v657 = vmul.f32 %v627, %v627
    %v658 = vsel %vm57, %v652, 0.0
    %659 = vadd.xlane.f32.xlu0 %v658
    %v660 = vpop.xlane.xlu0 %659
    %v661 = vsel %vm57, %v653, 0.0
    %662 = vadd.xlane.f32.xlu0 %v661
    %v663 = vpop.xlane.xlu0 %662
    %v664 = vsel %vm57, %v654, 0.0
    %665 = vadd.xlane.f32.xlu0 %v664
    %v666 = vpop.xlane.xlu0 %665
    %v667 = vsel %vm57, %v655, 0.0
    %668 = vadd.xlane.f32.xlu0 %v667
    %v669 = vpop.xlane.xlu0 %668
    %v670 = vsel %vm57, %v656, 0.0
    %671 = vadd.xlane.f32.xlu0 %v670
    %v672 = vpop.xlane.xlu0 %671
    %v673 = vsel %vm57, %v657, 0.0
    %674 = vadd.xlane.f32.xlu0 %v673
    %v675 = vpop.xlane.xlu0 %674
    %v676 = vmul.f32 %v660, %v82
    %v677 = vmul.f32 %v663, %v82
    %v678 = vmul.f32 %v666, %v82
    %v679 = vmul.f32 %v669, %v82
    %v680 = vmul.f32 %v672, %v82
    %v681 = vmul.f32 %v675, %v82
    %v682 = vsub.f32 %v622, %v646
    %v683 = vsub.f32 %v623, %v647
    %v684 = vsub.f32 %v624, %v648
    %v685 = vsub.f32 %v625, %v649
    %v686 = vsub.f32 %v626, %v650
    %v687 = vsub.f32 %v627, %v651
    %v688 = vmul.f32 %v646, %v646
    %v689 = vmul.f32 %v647, %v647
    %v690 = vmul.f32 %v648, %v648
    %v691 = vmul.f32 %v649, %v649
    %v692 = vmul.f32 %v650, %v650
    %v693 = vmul.f32 %v651, %v651
    %v694 = vsub.f32 %v676, %v688
    %v695 = vsub.f32 %v677, %v689
    %v696 = vsub.f32 %v678, %v690
    %v697 = vsub.f32 %v679, %v691
    %v698 = vsub.f32 %v680, %v692
    %v699 = vsub.f32 %v681, %v693
    %v700 = vadd.f32 %v694, 1e-05
    %v701 = vadd.f32 %v695, 1e-05
    %v702 = vadd.f32 %v696, 1e-05
    %v703 = vadd.f32 %v697, 1e-05
    %v704 = vadd.f32 %v698, 1e-05
    %v705 = vadd.f32 %v699, 1e-05
    %v706 = vrsqrt.pop %v700
    %v707 = vmul.f32 %v706, %v700
    %v708 = vmul.f32 %v707, %v706
    %v709 = vmul.f32 0.5, %v708
    %v710 = vsub.f32 1.5, %v709
    %v711 = vmul.f32 %v706, %v710
    %vm712 = vweird.f32 %v700
    %vm713 = vweird.f32 %v706
    %vm714 = vmor %vm712, %vm713
    %v715 = vsel %vm714, %v706, %v711
    %v716 = vrsqrt.pop %v701
    %v717 = vmul.f32 %v716, %v701
    %v718 = vmul.f32 %v717, %v716
    %v719 = vmul.f32 0.5, %v718
    %v720 = vsub.f32 1.5, %v719
    %v721 = vmul.f32 %v716, %v720
    %vm722 = vweird.f32 %v701
    %vm723 = vweird.f32 %v716
    %vm724 = vmor %vm722, %vm723
    %v725 = vsel %vm724, %v716, %v721
    %v726 = vrsqrt.pop %v702
    %v727 = vmul.f32 %v726, %v702
    %v728 = vmul.f32 %v727, %v726
    %v729 = vmul.f32 0.5, %v728
    %v730 = vsub.f32 1.5, %v729
    %v731 = vmul.f32 %v726, %v730
    %vm732 = vweird.f32 %v702
    %vm733 = vweird.f32 %v726
    %vm734 = vmor %vm732, %vm733
    %v735 = vsel %vm734, %v726, %v731
    %v736 = vrsqrt.pop %v703
    %v737 = vmul.f32 %v736, %v703
    %v738 = vmul.f32 %v737, %v736
    %v739 = vmul.f32 0.5, %v738
    %v740 = vsub.f32 1.5, %v739
    %v741 = vmul.f32 %v736, %v740
    %vm742 = vweird.f32 %v703
    %vm743 = vweird.f32 %v736
    %vm744 = vmor %vm742, %vm743
    %v745 = vsel %vm744, %v736, %v741
    %v746 = vrsqrt.pop %v704
    %v747 = vmul.f32 %v746, %v704
    %v748 = vmul.f32 %v747, %v746
    %v749 = vmul.f32 0.5, %v748
    %v750 = vsub.f32 1.5, %v749
    %v751 = vmul.f32 %v746, %v750
    %vm752 = vweird.f32 %v704
    %vm753 = vweird.f32 %v746
    %vm754 = vmor %vm752, %vm753
    %v755 = vsel %vm754, %v746, %v751
    %v756 = vrsqrt.pop %v705
    %v757 = vmul.f32 %v756, %v705
    %v758 = vmul.f32 %v757, %v756
    %v759 = vmul.f32 0.5, %v758
    %v760 = vsub.f32 1.5, %v759
    %v761 = vmul.f32 %v756, %v760
    %vm762 = vweird.f32 %v705
    %vm763 = vweird.f32 %v756
    %vm764 = vmor %vm762, %vm763
    %v765 = vsel %vm764, %v756, %v761
    %v766 = vmul.f32 %v682, %v715
    %v767 = vmul.f32 %v683, %v725
    %v768 = vmul.f32 %v684, %v735
    %v769 = vmul.f32 %v685, %v745
    %v770 = vmul.f32 %v686, %v755
    %v771 = vmul.f32 %v687, %v765
    %v772 = vperm.slane %v348, 2
    %v773 = vmul.f32 %v766, %v772
    %v774 = vmul.f32 %v767, %v772
    %v775 = vmul.f32 %v768, %v772
    %v776 = vmul.f32 %v769, %v772
    %v777 = vmul.f32 %v770, %v772
    %v778 = vmul.f32 %v771, %v772
    %v779 = vperm.slane %v348, 3
    %v780 = vadd.f32 %v773, %v779
    %v781 = vadd.f32 %v774, %v779
    %v782 = vadd.f32 %v775, %v779
    %v783 = vadd.f32 %v776, %v779
    %v784 = vadd.f32 %v777, %v779
    %v785 = vadd.f32 %v778, %v779
    %v786 = vpack.c.bf16 %v781, %v780
    %v787 = vpack.c.bf16 %v783, %v782
    %v788 = vpack.c.bf16 %v785, %v784
    %v789 = vperm.slane %v348, 4
    %v794 = vunpack.c.l.b16 %v328
    %v795 = vunpack.c.l.b16 %v329
    %v796 = vunpack.c.l.b16 %v330
    %v797 = vunpack.c.l.b16 %v331
    %v798 = vpack.c.b16 %v795, %v794
    %v799 = vpack.c.b16 %v797, %v796
    %v803 = vsel %vm57, %v786, 0
    %v806 = vsel %vm57, %v787, 0
    %v809 = vsel %vm57, %v788, 0
    %811 = vmatpush.bf16.msra.mxu0 0
    %812 = vmatpush.bf16.msra.mxu0 0
    %813 = vmatpush.bf16.msra.mxu0 0
    %814 = vmatpush.bf16.msra.mxu0 0
    %815 = vmatpush.bf16.msra.mxu0 0
    %816 = vmatpush.bf16.msra.mxu0 0
    %817 = vmatpush.bf16.msra.mxu0 %v799
    %818 = vmatpush.bf16.msra.mxu0 %v798
    %819 = vmatmul.bf16.gmra.mxu0 %v803
    %v820 = vpop.f32.mrf.mxu0
    %v821 = vadd.f32 %v789, %v820
    %v822 = vpop.f32.mrf.mxu0
    %v823 = vadd.f32 %v789, %v822
    %824 = vmatmul.bf16.gmra.mxu0 %v806
    %v825 = vpop.f32.mrf.mxu0
    %v826 = vadd.f32 %v789, %v825
    %v827 = vpop.f32.mrf.mxu0
    %v828 = vadd.f32 %v789, %v827
    %829 = vmatmul.bf16.gmra.mxu0 %v809
    %v830 = vpop.f32.mrf.mxu0
    %v831 = vadd.f32 %v789, %v830
    %v832 = vpop.f32.mrf.mxu0
    %v833 = vadd.f32 %v789, %v832
    %834 = vdwg.mxu0
    %v835 = vmax.f32 %v821, 0.0
    %v836 = vmax.f32 %v823, 0.0
    %v837 = vmax.f32 %v826, 0.0
    %v838 = vmax.f32 %v828, 0.0
    %v839 = vmax.f32 %v831, 0.0
    %v840 = vmax.f32 %v833, 0.0
    %v841 = vpack.c.bf16 %v836, %v835
    %v842 = vpack.c.bf16 %v838, %v837
    %v843 = vpack.c.bf16 %v840, %v839
    %v844 = vperm.slane %v348, 5
    %v861 = vunpack.c.l.b16 %v332
    %v862 = vunpack.c.l.b16 %v333
    %v863 = vunpack.c.l.b16 %v334
    %v864 = vunpack.c.l.b16 %v335
    %v865 = vunpack.c.l.b16 %v336
    %v866 = vunpack.c.l.b16 %v337
    %v867 = vunpack.c.l.b16 %v338
    %v868 = vunpack.c.l.b16 %v339
    %v869 = vunpack.c.l.b16 %v340
    %v870 = vunpack.c.l.b16 %v341
    %v871 = vunpack.c.l.b16 %v342
    %v872 = vunpack.c.l.b16 %v343
    %v873 = vunpack.c.l.b16 %v344
    %v874 = vunpack.c.l.b16 %v345
    %v875 = vunpack.c.l.b16 %v346
    %v876 = vunpack.c.l.b16 %v347
    %v877 = vpack.c.b16 %v862, %v861
    %v878 = vpack.c.b16 %v864, %v863
    %v879 = vpack.c.b16 %v866, %v865
    %v880 = vpack.c.b16 %v868, %v867
    %v881 = vpack.c.b16 %v870, %v869
    %v882 = vpack.c.b16 %v872, %v871
    %v883 = vpack.c.b16 %v874, %v873
    %v884 = vpack.c.b16 %v876, %v875
    %893 = vmatpush.bf16.msra.mxu0 %v884
    %894 = vmatpush.bf16.msra.mxu0 %v883
    %895 = vmatpush.bf16.msra.mxu0 %v882
    %896 = vmatpush.bf16.msra.mxu0 %v881
    %897 = vmatpush.bf16.msra.mxu0 %v880
    %898 = vmatpush.bf16.msra.mxu0 %v879
    %899 = vmatpush.bf16.msra.mxu0 %v878
    %900 = vmatpush.bf16.msra.mxu0 %v877
    %901 = vmatmul.bf16.gmra.mxu0 %v841
    %v902 = vpop.f32.mrf.mxu0
    %v903 = vadd.f32 %v844, %v902
    %v904 = vpop.f32.mrf.mxu0
    %v905 = vadd.f32 %v844, %v904
    %906 = vmatmul.bf16.gmra.mxu0 %v842
    %v907 = vpop.f32.mrf.mxu0
    %v908 = vadd.f32 %v844, %v907
    %v909 = vpop.f32.mrf.mxu0
    %v910 = vadd.f32 %v844, %v909
    %911 = vmatmul.bf16.gmra.mxu0 %v843
    %v912 = vpop.f32.mrf.mxu0
    %v913 = vadd.f32 %v844, %v912
    %v914 = vpop.f32.mrf.mxu0
    %v915 = vadd.f32 %v844, %v914
    %916 = vdwg.mxu0
    %v917 = vadd.f32 %v780, %v903
    %v918 = vadd.f32 %v781, %v905
    %v919 = vadd.f32 %v782, %v908
    %v920 = vadd.f32 %v783, %v910
    %v921 = vadd.f32 %v784, %v913
    %v922 = vadd.f32 %v785, %v915
    %v923 = vsel %vm57, %v917, 0.0
    %924 = vadd.xlane.f32.xlu0 %v923
    %v925 = vpop.xlane.xlu0 %924
    %v926 = vsel %vm57, %v918, 0.0
    %927 = vadd.xlane.f32.xlu0 %v926
    %v928 = vpop.xlane.xlu0 %927
    %v929 = vsel %vm57, %v919, 0.0
    %930 = vadd.xlane.f32.xlu0 %v929
    %v931 = vpop.xlane.xlu0 %930
    %v932 = vsel %vm57, %v920, 0.0
    %933 = vadd.xlane.f32.xlu0 %v932
    %v934 = vpop.xlane.xlu0 %933
    %v935 = vsel %vm57, %v921, 0.0
    %936 = vadd.xlane.f32.xlu0 %v935
    %v937 = vpop.xlane.xlu0 %936
    %v938 = vsel %vm57, %v922, 0.0
    %939 = vadd.xlane.f32.xlu0 %v938
    %v940 = vpop.xlane.xlu0 %939
    %v941 = vmul.f32 %v925, %v82
    %v942 = vmul.f32 %v928, %v82
    %v943 = vmul.f32 %v931, %v82
    %v944 = vmul.f32 %v934, %v82
    %v945 = vmul.f32 %v937, %v82
    %v946 = vmul.f32 %v940, %v82
    %v947 = vmul.f32 %v917, %v917
    %v948 = vmul.f32 %v918, %v918
    %v949 = vmul.f32 %v919, %v919
    %v950 = vmul.f32 %v920, %v920
    %v951 = vmul.f32 %v921, %v921
    %v952 = vmul.f32 %v922, %v922
    %v953 = vsel %vm57, %v947, 0.0
    %954 = vadd.xlane.f32.xlu0 %v953
    %v955 = vpop.xlane.xlu0 %954
    %v956 = vsel %vm57, %v948, 0.0
    %957 = vadd.xlane.f32.xlu0 %v956
    %v958 = vpop.xlane.xlu0 %957
    %v959 = vsel %vm57, %v949, 0.0
    %960 = vadd.xlane.f32.xlu0 %v959
    %v961 = vpop.xlane.xlu0 %960
    %v962 = vsel %vm57, %v950, 0.0
    %963 = vadd.xlane.f32.xlu0 %v962
    %v964 = vpop.xlane.xlu0 %963
    %v965 = vsel %vm57, %v951, 0.0
    %966 = vadd.xlane.f32.xlu0 %v965
    %v967 = vpop.xlane.xlu0 %966
    %v968 = vsel %vm57, %v952, 0.0
    %969 = vadd.xlane.f32.xlu0 %v968
    %v970 = vpop.xlane.xlu0 %969
    %v971 = vmul.f32 %v955, %v82
    %v972 = vmul.f32 %v958, %v82
    %v973 = vmul.f32 %v961, %v82
    %v974 = vmul.f32 %v964, %v82
    %v975 = vmul.f32 %v967, %v82
    %v976 = vmul.f32 %v970, %v82
    %v977 = vsub.f32 %v917, %v941
    %v978 = vsub.f32 %v918, %v942
    %v979 = vsub.f32 %v919, %v943
    %v980 = vsub.f32 %v920, %v944
    %v981 = vsub.f32 %v921, %v945
    %v982 = vsub.f32 %v922, %v946
    %v983 = vmul.f32 %v941, %v941
    %v984 = vmul.f32 %v942, %v942
    %v985 = vmul.f32 %v943, %v943
    %v986 = vmul.f32 %v944, %v944
    %v987 = vmul.f32 %v945, %v945
    %v988 = vmul.f32 %v946, %v946
    %v989 = vsub.f32 %v971, %v983
    %v990 = vsub.f32 %v972, %v984
    %v991 = vsub.f32 %v973, %v985
    %v992 = vsub.f32 %v974, %v986
    %v993 = vsub.f32 %v975, %v987
    %v994 = vsub.f32 %v976, %v988
    %v995 = vadd.f32 %v989, 1e-05
    %v996 = vadd.f32 %v990, 1e-05
    %v997 = vadd.f32 %v991, 1e-05
    %v998 = vadd.f32 %v992, 1e-05
    %v999 = vadd.f32 %v993, 1e-05
    %v1000 = vadd.f32 %v994, 1e-05
    %v1001 = vrsqrt.pop %v995
    %v1002 = vmul.f32 %v1001, %v995
    %v1003 = vmul.f32 %v1002, %v1001
    %v1004 = vmul.f32 0.5, %v1003
    %v1005 = vsub.f32 1.5, %v1004
    %v1006 = vmul.f32 %v1001, %v1005
    %vm1007 = vweird.f32 %v995
    %vm1008 = vweird.f32 %v1001
    %vm1009 = vmor %vm1007, %vm1008
    %v1010 = vsel %vm1009, %v1001, %v1006
    %v1011 = vrsqrt.pop %v996
    %v1012 = vmul.f32 %v1011, %v996
    %v1013 = vmul.f32 %v1012, %v1011
    %v1014 = vmul.f32 0.5, %v1013
    %v1015 = vsub.f32 1.5, %v1014
    %v1016 = vmul.f32 %v1011, %v1015
    %vm1017 = vweird.f32 %v996
    %vm1018 = vweird.f32 %v1011
    %vm1019 = vmor %vm1017, %vm1018
    %v1020 = vsel %vm1019, %v1011, %v1016
    %v1021 = vrsqrt.pop %v997
    %v1022 = vmul.f32 %v1021, %v997
    %v1023 = vmul.f32 %v1022, %v1021
    %v1024 = vmul.f32 0.5, %v1023
    %v1025 = vsub.f32 1.5, %v1024
    %v1026 = vmul.f32 %v1021, %v1025
    %vm1027 = vweird.f32 %v997
    %vm1028 = vweird.f32 %v1021
    %vm1029 = vmor %vm1027, %vm1028
    %v1030 = vsel %vm1029, %v1021, %v1026
    %v1031 = vrsqrt.pop %v998
    %v1032 = vmul.f32 %v1031, %v998
    %v1033 = vmul.f32 %v1032, %v1031
    %v1034 = vmul.f32 0.5, %v1033
    %v1035 = vsub.f32 1.5, %v1034
    %v1036 = vmul.f32 %v1031, %v1035
    %vm1037 = vweird.f32 %v998
    %vm1038 = vweird.f32 %v1031
    %vm1039 = vmor %vm1037, %vm1038
    %v1040 = vsel %vm1039, %v1031, %v1036
    %v1041 = vrsqrt.pop %v999
    %v1042 = vmul.f32 %v1041, %v999
    %v1043 = vmul.f32 %v1042, %v1041
    %v1044 = vmul.f32 0.5, %v1043
    %v1045 = vsub.f32 1.5, %v1044
    %v1046 = vmul.f32 %v1041, %v1045
    %vm1047 = vweird.f32 %v999
    %vm1048 = vweird.f32 %v1041
    %vm1049 = vmor %vm1047, %vm1048
    %v1050 = vsel %vm1049, %v1041, %v1046
    %v1051 = vrsqrt.pop %v1000
    %v1052 = vmul.f32 %v1051, %v1000
    %v1053 = vmul.f32 %v1052, %v1051
    %v1054 = vmul.f32 0.5, %v1053
    %v1055 = vsub.f32 1.5, %v1054
    %v1056 = vmul.f32 %v1051, %v1055
    %vm1057 = vweird.f32 %v1000
    %vm1058 = vweird.f32 %v1051
    %vm1059 = vmor %vm1057, %vm1058
    %v1060 = vsel %vm1059, %v1051, %v1056
    %v1061 = vmul.f32 %v977, %v1010
    %v1062 = vmul.f32 %v978, %v1020
    %v1063 = vmul.f32 %v979, %v1030
    %v1064 = vmul.f32 %v980, %v1040
    %v1065 = vmul.f32 %v981, %v1050
    %v1066 = vmul.f32 %v982, %v1060
    %v1067 = vperm.slane %v348, 6
    %v1068 = vmul.f32 %v1061, %v1067
    %v1069 = vmul.f32 %v1062, %v1067
    %v1070 = vmul.f32 %v1063, %v1067
    %v1071 = vmul.f32 %v1064, %v1067
    %v1072 = vmul.f32 %v1065, %v1067
    %v1073 = vmul.f32 %v1066, %v1067
    %v1074 = vperm.slane %v348, 7
    %v1075 = vadd.f32 %v1068, %v1074
    %v1076 = vadd.f32 %v1069, %v1074
    %v1077 = vadd.f32 %v1070, %v1074
    %v1078 = vadd.f32 %v1071, %v1074
    %v1079 = vadd.f32 %v1072, %v1074
    %v1080 = vadd.f32 %v1073, %v1074
    %s1081 = scalar_lea.vmem %s4, 16
    %v1082 = vld [vmem:[%s1081] sm:$0xf]
    %v1083 = vld [vmem:[%s1081 + $0x4] sm:$0xf]
    %v1084 = vld [vmem:[%s1081 + $0x8] sm:$0xf]
    %v1085 = vld [vmem:[%s1081 + $0xc] sm:$0xf]
    %s1086 = scalar_lea.vmem %s5, 16
    %v1087 = vld [vmem:[%s1086] sm:$0xf]
    %v1088 = vld [vmem:[%s1086 + $0x4] sm:$0xf]
    %v1089 = vld [vmem:[%s1086 + $0x8] sm:$0xf]
    %v1090 = vld [vmem:[%s1086 + $0xc] sm:$0xf]
    %s1091 = scalar_lea.vmem %s6, 16
    %v1092 = vld [vmem:[%s1091] sm:$0xf]
    %v1093 = vld [vmem:[%s1091 + $0x4] sm:$0xf]
    %v1094 = vld [vmem:[%s1091 + $0x8] sm:$0xf]
    %v1095 = vld [vmem:[%s1091 + $0xc] sm:$0xf]
    %s1096 = scalar_lea.vmem %s7, 64
    %v1097 = vld [vmem:[%s1096] sm:$0xf]
    %v1098 = vld [vmem:[%s1096 + $0x4] sm:$0xf]
    %v1099 = vld [vmem:[%s1096 + $0x8] sm:$0xf]
    %v1100 = vld [vmem:[%s1096 + $0xc] sm:$0xf]
    %v1101 = vld [vmem:[%s1096 + $0x10] sm:$0xf]
    %v1102 = vld [vmem:[%s1096 + $0x14] sm:$0xf]
    %v1103 = vld [vmem:[%s1096 + $0x18] sm:$0xf]
    %v1104 = vld [vmem:[%s1096 + $0x1c] sm:$0xf]
    %v1105 = vld [vmem:[%s1096 + $0x20] sm:$0xf]
    %v1106 = vld [vmem:[%s1096 + $0x24] sm:$0xf]
    %v1107 = vld [vmem:[%s1096 + $0x28] sm:$0xf]
    %v1108 = vld [vmem:[%s1096 + $0x2c] sm:$0xf]
    %v1109 = vld [vmem:[%s1096 + $0x30] sm:$0xf]
    %v1110 = vld [vmem:[%s1096 + $0x34] sm:$0xf]
    %v1111 = vld [vmem:[%s1096 + $0x38] sm:$0xf]
    %v1112 = vld [vmem:[%s1096 + $0x3c] sm:$0xf]
    %s1113 = scalar_lea.vmem %s8, 8
    %v1114 = vld [vmem:[%s1113] sm:$0xff]
    %v1115 = vpack.c.bf16 %v1076, %v1075
    %v1116 = vpack.c.bf16 %v1078, %v1077
    %v1117 = vpack.c.bf16 %v1080, %v1079
    %v1118 = vperm.slane %v1114, 0
    %v1123 = vunpack.c.l.b16 %v1082
    %v1124 = vunpack.c.l.b16 %v1083
    %v1125 = vunpack.c.l.b16 %v1084
    %v1126 = vunpack.c.l.b16 %v1085
    %v1127 = vpack.c.b16 %v1124, %v1123
    %v1128 = vpack.c.b16 %v1126, %v1125
    %v1132 = vsel %vm57, %v1115, 0
    %v1135 = vsel %vm57, %v1116, 0
    %v1138 = vsel %vm57, %v1117, 0
    %1140 = vmatpush.bf16.msra.mxu0 0
    %1141 = vmatpush.bf16.msra.mxu0 0
    %1142 = vmatpush.bf16.msra.mxu0 0
    %1143 = vmatpush.bf16.msra.mxu0 0
    %1144 = vmatpush.bf16.msra.mxu0 0
    %1145 = vmatpush.bf16.msra.mxu0 0
    %1146 = vmatpush.bf16.msra.mxu0 %v1128
    %1147 = vmatpush.bf16.msra.mxu0 %v1127
    %1148 = vmatmul.bf16.gmra.mxu0 %v1132
    %v1149 = vpop.f32.mrf.mxu0
    %v1150 = vadd.f32 %v1118, %v1149
    %v1151 = vpop.f32.mrf.mxu0
    %v1152 = vadd.f32 %v1118, %v1151
    %1153 = vmatmul.bf16.gmra.mxu0 %v1135
    %v1154 = vpop.f32.mrf.mxu0
    %v1155 = vadd.f32 %v1118, %v1154
    %v1156 = vpop.f32.mrf.mxu0
    %v1157 = vadd.f32 %v1118, %v1156
    %1158 = vmatmul.bf16.gmra.mxu0 %v1138
    %v1159 = vpop.f32.mrf.mxu0
    %v1160 = vadd.f32 %v1118, %v1159
    %v1161 = vpop.f32.mrf.mxu0
    %v1162 = vadd.f32 %v1118, %v1161
    %1163 = vdwg.mxu0
    %v1164 = vmul.f32 %v1150, 0.17677669
    %v1165 = vmul.f32 %v1152, 0.17677669
    %v1166 = vmul.f32 %v1155, 0.17677669
    %v1167 = vmul.f32 %v1157, 0.17677669
    %v1168 = vmul.f32 %v1160, 0.17677669
    %v1169 = vmul.f32 %v1162, 0.17677669
    %v1170 = vpack.c.bf16 %v1165, %v1164
    %v1171 = vpack.c.bf16 %v1167, %v1166
    %v1172 = vpack.c.bf16 %v1169, %v1168
    %v1173 = vpack.c.bf16 %v1152, %v1150
    %v1174 = vpack.c.bf16 %v1157, %v1155
    %v1175 = vpack.c.bf16 %v1162, %v1160
    %1179 = vrot.lane.b32.xlu0 %v1173, 96
    %v1180 = vpop.permute.xlu0 %1179
    %1181 = vrot.lane.b32.xlu0 %v1174, 96
    %v1182 = vpop.permute.xlu0 %1181
    %1183 = vrot.lane.b32.xlu0 %v1175, 96
    %v1184 = vpop.permute.xlu0 %1183
    %v1186 = vsel %vm57, %v1170, 0
    %v1189 = vsel %vm57, %v1171, 0
    %v1192 = vsel %vm57, %v1172, 0
    %v1195 = vsel %vm57, %v1180, 0
    %v1198 = vsel %vm57, %v1182, 0
    %v1201 = vsel %vm57, %v1184, 0
    %1203 = vmatpush.bf16.xpose.msra.mxu0 0
    %1204 = vmatpush.bf16.xpose.msra.mxu0 0
    %1205 = vmatpush.bf16.xpose.msra.mxu0 0
    %1206 = vmatpush.bf16.xpose.msra.mxu0 0
    %1207 = vmatpush.bf16.xpose.msra.mxu0 0
    %1208 = vmatpush.bf16.xpose.msra.mxu0 %v1201
    %1209 = vmatpush.bf16.xpose.msra.mxu0 %v1198
    %1210 = vmatpush.bf16.xpose.msra.mxu0 %v1195
    %1211 = vmatmul.bf16.gmra.mxu0 %v1186
    %v1212 = vpop.f32.mrf.mxu0
    %v1213 = vadd.f32 %v314, %v1212
    %v1214 = vpop.f32.mrf.mxu0
    %v1215 = vadd.f32 %v315, %v1214
    %1216 = vmatmul.bf16.gmra.mxu0 %v1189
    %v1217 = vpop.f32.mrf.mxu0
    %v1218 = vadd.f32 %v316, %v1217
    %v1219 = vpop.f32.mrf.mxu0
    %v1220 = vadd.f32 %v317, %v1219
    %1221 = vmatmul.bf16.gmra.mxu0 %v1192
    %v1222 = vpop.f32.mrf.mxu0
    %v1223 = vadd.f32 %v318, %v1222
    %v1224 = vpop.f32.mrf.mxu0
    %v1225 = vadd.f32 %v319, %v1224
    %1226 = vdwg.mxu0
    %v1227 = vsel %vm461, %v1213, -inf
    %1228 = vmax.xlane.f32.xlu0 %v1227
    %v1229 = vpop.xlane.xlu0 %1228
    %v1230 = vsel %vm461, %v1215, -inf
    %1231 = vmax.xlane.f32.xlu0 %v1230
    %v1232 = vpop.xlane.xlu0 %1231
    %v1233 = vsel %vm461, %v1218, -inf
    %1234 = vmax.xlane.f32.xlu0 %v1233
    %v1235 = vpop.xlane.xlu0 %1234
    %v1236 = vsel %vm461, %v1220, -inf
    %1237 = vmax.xlane.f32.xlu0 %v1236
    %v1238 = vpop.xlane.xlu0 %1237
    %v1239 = vsel %vm461, %v1223, -inf
    %1240 = vmax.xlane.f32.xlu0 %v1239
    %v1241 = vpop.xlane.xlu0 %1240
    %v1242 = vsel %vm461, %v1225, -inf
    %1243 = vmax.xlane.f32.xlu0 %v1242
    %v1244 = vpop.xlane.xlu0 %1243
    %v1245 = vsub.f32 %v1213, %v1229
    %v1246 = vsub.f32 %v1215, %v1232
    %v1247 = vsub.f32 %v1218, %v1235
    %v1248 = vsub.f32 %v1220, %v1238
    %v1249 = vsub.f32 %v1223, %v1241
    %v1250 = vsub.f32 %v1225, %v1244
    %v1251 = vmul.f32 %v1245, 1.442695
    %v1252 = vpow.pop %v1251
    %v1253 = vmul.f32 %v1246, 1.442695
    %v1254 = vpow.pop %v1253
    %v1255 = vmul.f32 %v1247, 1.442695
    %v1256 = vpow.pop %v1255
    %v1257 = vmul.f32 %v1248, 1.442695
    %v1258 = vpow.pop %v1257
    %v1259 = vmul.f32 %v1249, 1.442695
    %v1260 = vpow.pop %v1259
    %v1261 = vmul.f32 %v1250, 1.442695
    %v1262 = vpow.pop %v1261
    %v1263 = vsel %vm461, %v1252, 0.0
    %1264 = vadd.xlane.f32.xlu0 %v1263
    %v1265 = vpop.xlane.xlu0 %1264
    %v1266 = vsel %vm461, %v1254, 0.0
    %1267 = vadd.xlane.f32.xlu0 %v1266
    %v1268 = vpop.xlane.xlu0 %1267
    %v1269 = vsel %vm461, %v1256, 0.0
    %1270 = vadd.xlane.f32.xlu0 %v1269
    %v1271 = vpop.xlane.xlu0 %1270
    %v1272 = vsel %vm461, %v1258, 0.0
    %1273 = vadd.xlane.f32.xlu0 %v1272
    %v1274 = vpop.xlane.xlu0 %1273
    %v1275 = vsel %vm461, %v1260, 0.0
    %1276 = vadd.xlane.f32.xlu0 %v1275
    %v1277 = vpop.xlane.xlu0 %1276
    %v1278 = vsel %vm461, %v1262, 0.0
    %1279 = vadd.xlane.f32.xlu0 %v1278
    %v1280 = vpop.xlane.xlu0 %1279
    %v1281 = vrcp.pop %v1265
    %v1282 = vrcp.pop %v1268
    %v1283 = vrcp.pop %v1271
    %v1284 = vrcp.pop %v1274
    %v1285 = vrcp.pop %v1277
    %v1286 = vrcp.pop %v1280
    %v1287 = vmul.f32 %v1252, %v1281
    %v1288 = vmul.f32 %v1254, %v1282
    %v1289 = vmul.f32 %v1256, %v1283
    %v1290 = vmul.f32 %v1258, %v1284
    %v1291 = vmul.f32 %v1260, %v1285
    %v1292 = vmul.f32 %v1262, %v1286
    %v1293 = vpack.c.bf16 %v1288, %v1287
    %v1294 = vpack.c.bf16 %v1290, %v1289
    %v1295 = vpack.c.bf16 %v1292, %v1291
    %1296 = vrot.lane.b32.xlu0 %v1173, 64
    %v1297 = vpop.permute.xlu0 %1296
    %1298 = vrot.lane.b32.xlu0 %v1174, 64
    %v1299 = vpop.permute.xlu0 %1298
    %1300 = vrot.lane.b32.xlu0 %v1175, 64
    %v1301 = vpop.permute.xlu0 %1300
    %v1306 = vsel %vm461, %v1293, 0
    %v1309 = vsel %vm461, %v1294, 0
    %v1312 = vsel %vm461, %v1295, 0
    %1314 = vmatpush.bf16.msra.mxu0 0
    %1315 = vmatpush.bf16.msra.mxu0 0
    %1316 = vmatpush.bf16.msra.mxu0 0
    %1317 = vmatpush.bf16.msra.mxu0 0
    %1318 = vmatpush.bf16.msra.mxu0 0
    %1319 = vmatpush.bf16.msra.mxu0 %v1301
    %1320 = vmatpush.bf16.msra.mxu0 %v1299
    %1321 = vmatpush.bf16.msra.mxu0 %v1297
    %1322 = vmatmul.bf16.gmra.mxu0 %v1306
    %v1323 = vpop.f32.mrf.mxu0
    %v1324 = vadd.f32 0.0, %v1323
    %v1325 = vpop.f32.mrf.mxu0
    %v1326 = vadd.f32 0.0, %v1325
    %1327 = vmatmul.bf16.gmra.mxu0 %v1309
    %v1328 = vpop.f32.mrf.mxu0
    %v1329 = vadd.f32 0.0, %v1328
    %v1330 = vpop.f32.mrf.mxu0
    %v1331 = vadd.f32 0.0, %v1330
    %1332 = vmatmul.bf16.gmra.mxu0 %v1312
    %v1333 = vpop.f32.mrf.mxu0
    %v1334 = vadd.f32 0.0, %v1333
    %v1335 = vpop.f32.mrf.mxu0
    %v1336 = vadd.f32 0.0, %v1335
    %1337 = vdwg.mxu0
    %v1338 = vpack.c.bf16 %v1326, %v1324
    %v1339 = vpack.c.bf16 %v1331, %v1329
    %v1340 = vpack.c.bf16 %v1336, %v1334
    %v1341 = vperm.slane %v1114, 1
    %v1346 = vunpack.c.l.b16 %v1087
    %v1347 = vunpack.c.l.b16 %v1088
    %v1348 = vunpack.c.l.b16 %v1089
    %v1349 = vunpack.c.l.b16 %v1090
    %v1350 = vpack.c.b16 %v1347, %v1346
    %v1351 = vpack.c.b16 %v1349, %v1348
    %v1355 = vsel %vm57, %v1338, 0
    %v1358 = vsel %vm57, %v1339, 0
    %v1361 = vsel %vm57, %v1340, 0
    %1363 = vmatpush.bf16.msra.mxu0 0
    %1364 = vmatpush.bf16.msra.mxu0 0
    %1365 = vmatpush.bf16.msra.mxu0 0
    %1366 = vmatpush.bf16.msra.mxu0 0
    %1367 = vmatpush.bf16.msra.mxu0 0
    %1368 = vmatpush.bf16.msra.mxu0 0
    %1369 = vmatpush.bf16.msra.mxu0 %v1351
    %1370 = vmatpush.bf16.msra.mxu0 %v1350
    %1371 = vmatmul.bf16.gmra.mxu0 %v1355
    %v1372 = vpop.f32.mrf.mxu0
    %v1373 = vadd.f32 %v1341, %v1372
    %v1374 = vpop.f32.mrf.mxu0
    %v1375 = vadd.f32 %v1341, %v1374
    %1376 = vmatmul.bf16.gmra.mxu0 %v1358
    %v1377 = vpop.f32.mrf.mxu0
    %v1378 = vadd.f32 %v1341, %v1377
    %v1379 = vpop.f32.mrf.mxu0
    %v1380 = vadd.f32 %v1341, %v1379
    %1381 = vmatmul.bf16.gmra.mxu0 %v1361
    %v1382 = vpop.f32.mrf.mxu0
    %v1383 = vadd.f32 %v1341, %v1382
    %v1384 = vpop.f32.mrf.mxu0
    %v1385 = vadd.f32 %v1341, %v1384
    %1386 = vdwg.mxu0
    %v1387 = vadd.f32 %v1075, %v1373
    %v1388 = vadd.f32 %v1076, %v1375
    %v1389 = vadd.f32 %v1077, %v1378
    %v1390 = vadd.f32 %v1078, %v1380
    %v1391 = vadd.f32 %v1079, %v1383
    %v1392 = vadd.f32 %v1080, %v1385
    %v1393 = vsel %vm57, %v1387, 0.0
    %1394 = vadd.xlane.f32.xlu0 %v1393
    %v1395 = vpop.xlane.xlu0 %1394
    %v1396 = vsel %vm57, %v1388, 0.0
    %1397 = vadd.xlane.f32.xlu0 %v1396
    %v1398 = vpop.xlane.xlu0 %1397
    %v1399 = vsel %vm57, %v1389, 0.0
    %1400 = vadd.xlane.f32.xlu0 %v1399
    %v1401 = vpop.xlane.xlu0 %1400
    %v1402 = vsel %vm57, %v1390, 0.0
    %1403 = vadd.xlane.f32.xlu0 %v1402
    %v1404 = vpop.xlane.xlu0 %1403
    %v1405 = vsel %vm57, %v1391, 0.0
    %1406 = vadd.xlane.f32.xlu0 %v1405
    %v1407 = vpop.xlane.xlu0 %1406
    %v1408 = vsel %vm57, %v1392, 0.0
    %1409 = vadd.xlane.f32.xlu0 %v1408
    %v1410 = vpop.xlane.xlu0 %1409
    %v1411 = vmul.f32 %v1395, %v82
    %v1412 = vmul.f32 %v1398, %v82
    %v1413 = vmul.f32 %v1401, %v82
    %v1414 = vmul.f32 %v1404, %v82
    %v1415 = vmul.f32 %v1407, %v82
    %v1416 = vmul.f32 %v1410, %v82
    %v1417 = vmul.f32 %v1387, %v1387
    %v1418 = vmul.f32 %v1388, %v1388
    %v1419 = vmul.f32 %v1389, %v1389
    %v1420 = vmul.f32 %v1390, %v1390
    %v1421 = vmul.f32 %v1391, %v1391
    %v1422 = vmul.f32 %v1392, %v1392
    %v1423 = vsel %vm57, %v1417, 0.0
    %1424 = vadd.xlane.f32.xlu0 %v1423
    %v1425 = vpop.xlane.xlu0 %1424
    %v1426 = vsel %vm57, %v1418, 0.0
    %1427 = vadd.xlane.f32.xlu0 %v1426
    %v1428 = vpop.xlane.xlu0 %1427
    %v1429 = vsel %vm57, %v1419, 0.0
    %1430 = vadd.xlane.f32.xlu0 %v1429
    %v1431 = vpop.xlane.xlu0 %1430
    %v1432 = vsel %vm57, %v1420, 0.0
    %1433 = vadd.xlane.f32.xlu0 %v1432
    %v1434 = vpop.xlane.xlu0 %1433
    %v1435 = vsel %vm57, %v1421, 0.0
    %1436 = vadd.xlane.f32.xlu0 %v1435
    %v1437 = vpop.xlane.xlu0 %1436
    %v1438 = vsel %vm57, %v1422, 0.0
    %1439 = vadd.xlane.f32.xlu0 %v1438
    %v1440 = vpop.xlane.xlu0 %1439
    %v1441 = vmul.f32 %v1425, %v82
    %v1442 = vmul.f32 %v1428, %v82
    %v1443 = vmul.f32 %v1431, %v82
    %v1444 = vmul.f32 %v1434, %v82
    %v1445 = vmul.f32 %v1437, %v82
    %v1446 = vmul.f32 %v1440, %v82
    %v1447 = vsub.f32 %v1387, %v1411
    %v1448 = vsub.f32 %v1388, %v1412
    %v1449 = vsub.f32 %v1389, %v1413
    %v1450 = vsub.f32 %v1390, %v1414
    %v1451 = vsub.f32 %v1391, %v1415
    %v1452 = vsub.f32 %v1392, %v1416
    %v1453 = vmul.f32 %v1411, %v1411
    %v1454 = vmul.f32 %v1412, %v1412
    %v1455 = vmul.f32 %v1413, %v1413
    %v1456 = vmul.f32 %v1414, %v1414
    %v1457 = vmul.f32 %v1415, %v1415
    %v1458 = vmul.f32 %v1416, %v1416
    %v1459 = vsub.f32 %v1441, %v1453
    %v1460 = vsub.f32 %v1442, %v1454
    %v1461 = vsub.f32 %v1443, %v1455
    %v1462 = vsub.f32 %v1444, %v1456
    %v1463 = vsub.f32 %v1445, %v1457
    %v1464 = vsub.f32 %v1446, %v1458
    %v1465 = vadd.f32 %v1459, 1e-05
    %v1466 = vadd.f32 %v1460, 1e-05
    %v1467 = vadd.f32 %v1461, 1e-05
    %v1468 = vadd.f32 %v1462, 1e-05
    %v1469 = vadd.f32 %v1463, 1e-05
    %v1470 = vadd.f32 %v1464, 1e-05
    %v1471 = vrsqrt.pop %v1465
    %v1472 = vmul.f32 %v1471, %v1465
    %v1473 = vmul.f32 %v1472, %v1471
    %v1474 = vmul.f32 0.5, %v1473
    %v1475 = vsub.f32 1.5, %v1474
    %v1476 = vmul.f32 %v1471, %v1475
    %vm1477 = vweird.f32 %v1465
    %vm1478 = vweird.f32 %v1471
    %vm1479 = vmor %vm1477, %vm1478
    %v1480 = vsel %vm1479, %v1471, %v1476
    %v1481 = vrsqrt.pop %v1466
    %v1482 = vmul.f32 %v1481, %v1466
    %v1483 = vmul.f32 %v1482, %v1481
    %v1484 = vmul.f32 0.5, %v1483
    %v1485 = vsub.f32 1.5, %v1484
    %v1486 = vmul.f32 %v1481, %v1485
    %vm1487 = vweird.f32 %v1466
    %vm1488 = vweird.f32 %v1481
    %vm1489 = vmor %vm1487, %vm1488
    %v1490 = vsel %vm1489, %v1481, %v1486
    %v1491 = vrsqrt.pop %v1467
    %v1492 = vmul.f32 %v1491, %v1467
    %v1493 = vmul.f32 %v1492, %v1491
    %v1494 = vmul.f32 0.5, %v1493
    %v1495 = vsub.f32 1.5, %v1494
    %v1496 = vmul.f32 %v1491, %v1495
    %vm1497 = vweird.f32 %v1467
    %vm1498 = vweird.f32 %v1491
    %vm1499 = vmor %vm1497, %vm1498
    %v1500 = vsel %vm1499, %v1491, %v1496
    %v1501 = vrsqrt.pop %v1468
    %v1502 = vmul.f32 %v1501, %v1468
    %v1503 = vmul.f32 %v1502, %v1501
    %v1504 = vmul.f32 0.5, %v1503
    %v1505 = vsub.f32 1.5, %v1504
    %v1506 = vmul.f32 %v1501, %v1505
    %vm1507 = vweird.f32 %v1468
    %vm1508 = vweird.f32 %v1501
    %vm1509 = vmor %vm1507, %vm1508
    %v1510 = vsel %vm1509, %v1501, %v1506
    %v1511 = vrsqrt.pop %v1469
    %v1512 = vmul.f32 %v1511, %v1469
    %v1513 = vmul.f32 %v1512, %v1511
    %v1514 = vmul.f32 0.5, %v1513
    %v1515 = vsub.f32 1.5, %v1514
    %v1516 = vmul.f32 %v1511, %v1515
    %vm1517 = vweird.f32 %v1469
    %vm1518 = vweird.f32 %v1511
    %vm1519 = vmor %vm1517, %vm1518
    %v1520 = vsel %vm1519, %v1511, %v1516
    %v1521 = vrsqrt.pop %v1470
    %v1522 = vmul.f32 %v1521, %v1470
    %v1523 = vmul.f32 %v1522, %v1521
    %v1524 = vmul.f32 0.5, %v1523
    %v1525 = vsub.f32 1.5, %v1524
    %v1526 = vmul.f32 %v1521, %v1525
    %vm1527 = vweird.f32 %v1470
    %vm1528 = vweird.f32 %v1521
    %vm1529 = vmor %vm1527, %vm1528
    %v1530 = vsel %vm1529, %v1521, %v1526
    %v1531 = vmul.f32 %v1447, %v1480
    %v1532 = vmul.f32 %v1448, %v1490
    %v1533 = vmul.f32 %v1449, %v1500
    %v1534 = vmul.f32 %v1450, %v1510
    %v1535 = vmul.f32 %v1451, %v1520
    %v1536 = vmul.f32 %v1452, %v1530
    %v1537 = vperm.slane %v1114, 2
    %v1538 = vmul.f32 %v1531, %v1537
    %v1539 = vmul.f32 %v1532, %v1537
    %v1540 = vmul.f32 %v1533, %v1537
    %v1541 = vmul.f32 %v1534, %v1537
    %v1542 = vmul.f32 %v1535, %v1537
    %v1543 = vmul.f32 %v1536, %v1537
    %v1544 = vperm.slane %v1114, 3
    %v1545 = vadd.f32 %v1538, %v1544
    %v1546 = vadd.f32 %v1539, %v1544
    %v1547 = vadd.f32 %v1540, %v1544
    %v1548 = vadd.f32 %v1541, %v1544
    %v1549 = vadd.f32 %v1542, %v1544
    %v1550 = vadd.f32 %v1543, %v1544
    %v1551 = vpack.c.bf16 %v1546, %v1545
    %v1552 = vpack.c.bf16 %v1548, %v1547
    %v1553 = vpack.c.bf16 %v1550, %v1549
    %v1554 = vperm.slane %v1114, 4
    %v1559 = vunpack.c.l.b16 %v1092
    %v1560 = vunpack.c.l.b16 %v1093
    %v1561 = vunpack.c.l.b16 %v1094
    %v1562 = vunpack.c.l.b16 %v1095
    %v1563 = vpack.c.b16 %v1560, %v1559
    %v1564 = vpack.c.b16 %v1562, %v1561
    %v1568 = vsel %vm57, %v1551, 0
    %v1571 = vsel %vm57, %v1552, 0
    %v1574 = vsel %vm57, %v1553, 0
    %1576 = vmatpush.bf16.msra.mxu0 0
    %1577 = vmatpush.bf16.msra.mxu0 0
    %1578 = vmatpush.bf16.msra.mxu0 0
    %1579 = vmatpush.bf16.msra.mxu0 0
    %1580 = vmatpush.bf16.msra.mxu0 0
    %1581 = vmatpush.bf16.msra.mxu0 0
    %1582 = vmatpush.bf16.msra.mxu0 %v1564
    %1583 = vmatpush.bf16.msra.mxu0 %v1563
    %1584 = vmatmul.bf16.gmra.mxu0 %v1568
    %v1585 = vpop.f32.mrf.mxu0
    %v1586 = vadd.f32 %v1554, %v1585
    %v1587 = vpop.f32.mrf.mxu0
    %v1588 = vadd.f32 %v1554, %v1587
    %1589 = vmatmul.bf16.gmra.mxu0 %v1571
    %v1590 = vpop.f32.mrf.mxu0
    %v1591 = vadd.f32 %v1554, %v1590
    %v1592 = vpop.f32.mrf.mxu0
    %v1593 = vadd.f32 %v1554, %v1592
    %1594 = vmatmul.bf16.gmra.mxu0 %v1574
    %v1595 = vpop.f32.mrf.mxu0
    %v1596 = vadd.f32 %v1554, %v1595
    %v1597 = vpop.f32.mrf.mxu0
    %v1598 = vadd.f32 %v1554, %v1597
    %1599 = vdwg.mxu0
    %v1600 = vmax.f32 %v1586, 0.0
    %v1601 = vmax.f32 %v1588, 0.0
    %v1602 = vmax.f32 %v1591, 0.0
    %v1603 = vmax.f32 %v1593, 0.0
    %v1604 = vmax.f32 %v1596, 0.0
    %v1605 = vmax.f32 %v1598, 0.0
    %v1606 = vpack.c.bf16 %v1601, %v1600
    %v1607 = vpack.c.bf16 %v1603, %v1602
    %v1608 = vpack.c.bf16 %v1605, %v1604
    %v1609 = vperm.slane %v1114, 5
    %v1626 = vunpack.c.l.b16 %v1097
    %v1627 = vunpack.c.l.b16 %v1098
    %v1628 = vunpack.c.l.b16 %v1099
    %v1629 = vunpack.c.l.b16 %v1100
    %v1630 = vunpack.c.l.b16 %v1101
    %v1631 = vunpack.c.l.b16 %v1102
    %v1632 = vunpack.c.l.b16 %v1103
    %v1633 = vunpack.c.l.b16 %v1104
    %v1634 = vunpack.c.l.b16 %v1105
    %v1635 = vunpack.c.l.b16 %v1106
    %v1636 = vunpack.c.l.b16 %v1107
    %v1637 = vunpack.c.l.b16 %v1108
    %v1638 = vunpack.c.l.b16 %v1109
    %v1639 = vunpack.c.l.b16 %v1110
    %v1640 = vunpack.c.l.b16 %v1111
    %v1641 = vunpack.c.l.b16 %v1112
    %v1642 = vpack.c.b16 %v1627, %v1626
    %v1643 = vpack.c.b16 %v1629, %v1628
    %v1644 = vpack.c.b16 %v1631, %v1630
    %v1645 = vpack.c.b16 %v1633, %v1632
    %v1646 = vpack.c.b16 %v1635, %v1634
    %v1647 = vpack.c.b16 %v1637, %v1636
    %v1648 = vpack.c.b16 %v1639, %v1638
    %v1649 = vpack.c.b16 %v1641, %v1640
    %1658 = vmatpush.bf16.msra.mxu0 %v1649
    %1659 = vmatpush.bf16.msra.mxu0 %v1648
    %1660 = vmatpush.bf16.msra.mxu0 %v1647
    %1661 = vmatpush.bf16.msra.mxu0 %v1646
    %1662 = vmatpush.bf16.msra.mxu0 %v1645
    %1663 = vmatpush.bf16.msra.mxu0 %v1644
    %1664 = vmatpush.bf16.msra.mxu0 %v1643
    %1665 = vmatpush.bf16.msra.mxu0 %v1642
    %1666 = vmatmul.bf16.gmra.mxu0 %v1606
    %v1667 = vpop.f32.mrf.mxu0
    %v1668 = vadd.f32 %v1609, %v1667
    %v1669 = vpop.f32.mrf.mxu0
    %v1670 = vadd.f32 %v1609, %v1669
    %1671 = vmatmul.bf16.gmra.mxu0 %v1607
    %v1672 = vpop.f32.mrf.mxu0
    %v1673 = vadd.f32 %v1609, %v1672
    %v1674 = vpop.f32.mrf.mxu0
    %v1675 = vadd.f32 %v1609, %v1674
    %1676 = vmatmul.bf16.gmra.mxu0 %v1608
    %v1677 = vpop.f32.mrf.mxu0
    %v1678 = vadd.f32 %v1609, %v1677
    %v1679 = vpop.f32.mrf.mxu0
    %v1680 = vadd.f32 %v1609, %v1679
    %1681 = vdwg.mxu0
    %v1682 = vadd.f32 %v1545, %v1668
    %v1683 = vadd.f32 %v1546, %v1670
    %v1684 = vadd.f32 %v1547, %v1673
    %v1685 = vadd.f32 %v1548, %v1675
    %v1686 = vadd.f32 %v1549, %v1678
    %v1687 = vadd.f32 %v1550, %v1680
    %v1688 = vsel %vm57, %v1682, 0.0
    %1689 = vadd.xlane.f32.xlu0 %v1688
    %v1690 = vpop.xlane.xlu0 %1689
    %v1691 = vsel %vm57, %v1683, 0.0
    %1692 = vadd.xlane.f32.xlu0 %v1691
    %v1693 = vpop.xlane.xlu0 %1692
    %v1694 = vsel %vm57, %v1684, 0.0
    %1695 = vadd.xlane.f32.xlu0 %v1694
    %v1696 = vpop.xlane.xlu0 %1695
    %v1697 = vsel %vm57, %v1685, 0.0
    %1698 = vadd.xlane.f32.xlu0 %v1697
    %v1699 = vpop.xlane.xlu0 %1698
    %v1700 = vsel %vm57, %v1686, 0.0
    %1701 = vadd.xlane.f32.xlu0 %v1700
    %v1702 = vpop.xlane.xlu0 %1701
    %v1703 = vsel %vm57, %v1687, 0.0
    %1704 = vadd.xlane.f32.xlu0 %v1703
    %v1705 = vpop.xlane.xlu0 %1704
    %v1706 = vmul.f32 %v1690, %v82
    %v1707 = vmul.f32 %v1693, %v82
    %v1708 = vmul.f32 %v1696, %v82
    %v1709 = vmul.f32 %v1699, %v82
    %v1710 = vmul.f32 %v1702, %v82
    %v1711 = vmul.f32 %v1705, %v82
    %v1712 = vmul.f32 %v1682, %v1682
    %v1713 = vmul.f32 %v1683, %v1683
    %v1714 = vmul.f32 %v1684, %v1684
    %v1715 = vmul.f32 %v1685, %v1685
    %v1716 = vmul.f32 %v1686, %v1686
    %v1717 = vmul.f32 %v1687, %v1687
    %v1718 = vsel %vm57, %v1712, 0.0
    %1719 = vadd.xlane.f32.xlu0 %v1718
    %v1720 = vpop.xlane.xlu0 %1719
    %v1721 = vsel %vm57, %v1713, 0.0
    %1722 = vadd.xlane.f32.xlu0 %v1721
    %v1723 = vpop.xlane.xlu0 %1722
    %v1724 = vsel %vm57, %v1714, 0.0
    %1725 = vadd.xlane.f32.xlu0 %v1724
    %v1726 = vpop.xlane.xlu0 %1725
    %v1727 = vsel %vm57, %v1715, 0.0
    %1728 = vadd.xlane.f32.xlu0 %v1727
    %v1729 = vpop.xlane.xlu0 %1728
    %v1730 = vsel %vm57, %v1716, 0.0
    %1731 = vadd.xlane.f32.xlu0 %v1730
    %v1732 = vpop.xlane.xlu0 %1731
    %v1733 = vsel %vm57, %v1717, 0.0
    %1734 = vadd.xlane.f32.xlu0 %v1733
    %v1735 = vpop.xlane.xlu0 %1734
    %v1736 = vmul.f32 %v1720, %v82
    %v1737 = vmul.f32 %v1723, %v82
    %v1738 = vmul.f32 %v1726, %v82
    %v1739 = vmul.f32 %v1729, %v82
    %v1740 = vmul.f32 %v1732, %v82
    %v1741 = vmul.f32 %v1735, %v82
    %v1742 = vsub.f32 %v1682, %v1706
    %v1743 = vsub.f32 %v1683, %v1707
    %v1744 = vsub.f32 %v1684, %v1708
    %v1745 = vsub.f32 %v1685, %v1709
    %v1746 = vsub.f32 %v1686, %v1710
    %v1747 = vsub.f32 %v1687, %v1711
    %v1748 = vmul.f32 %v1706, %v1706
    %v1749 = vmul.f32 %v1707, %v1707
    %v1750 = vmul.f32 %v1708, %v1708
    %v1751 = vmul.f32 %v1709, %v1709
    %v1752 = vmul.f32 %v1710, %v1710
    %v1753 = vmul.f32 %v1711, %v1711
    %v1754 = vsub.f32 %v1736, %v1748
    %v1755 = vsub.f32 %v1737, %v1749
    %v1756 = vsub.f32 %v1738, %v1750
    %v1757 = vsub.f32 %v1739, %v1751
    %v1758 = vsub.f32 %v1740, %v1752
    %v1759 = vsub.f32 %v1741, %v1753
    %v1760 = vadd.f32 %v1754, 1e-05
    %v1761 = vadd.f32 %v1755, 1e-05
    %v1762 = vadd.f32 %v1756, 1e-05
    %v1763 = vadd.f32 %v1757, 1e-05
    %v1764 = vadd.f32 %v1758, 1e-05
    %v1765 = vadd.f32 %v1759, 1e-05
    %v1766 = vrsqrt.pop %v1760
    %v1767 = vmul.f32 %v1766, %v1760
    %v1768 = vmul.f32 %v1767, %v1766
    %v1769 = vmul.f32 0.5, %v1768
    %v1770 = vsub.f32 1.5, %v1769
    %v1771 = vmul.f32 %v1766, %v1770
    %vm1772 = vweird.f32 %v1760
    %vm1773 = vweird.f32 %v1766
    %vm1774 = vmor %vm1772, %vm1773
    %v1775 = vsel %vm1774, %v1766, %v1771
    %v1776 = vrsqrt.pop %v1761
    %v1777 = vmul.f32 %v1776, %v1761
    %v1778 = vmul.f32 %v1777, %v1776
    %v1779 = vmul.f32 0.5, %v1778
    %v1780 = vsub.f32 1.5, %v1779
    %v1781 = vmul.f32 %v1776, %v1780
    %vm1782 = vweird.f32 %v1761
    %vm1783 = vweird.f32 %v1776
    %vm1784 = vmor %vm1782, %vm1783
    %v1785 = vsel %vm1784, %v1776, %v1781
    %v1786 = vrsqrt.pop %v1762
    %v1787 = vmul.f32 %v1786, %v1762
    %v1788 = vmul.f32 %v1787, %v1786
    %v1789 = vmul.f32 0.5, %v1788
    %v1790 = vsub.f32 1.5, %v1789
    %v1791 = vmul.f32 %v1786, %v1790
    %vm1792 = vweird.f32 %v1762
    %vm1793 = vweird.f32 %v1786
    %vm1794 = vmor %vm1792, %vm1793
    %v1795 = vsel %vm1794, %v1786, %v1791
    %v1796 = vrsqrt.pop %v1763
    %v1797 = vmul.f32 %v1796, %v1763
    %v1798 = vmul.f32 %v1797, %v1796
    %v1799 = vmul.f32 0.5, %v1798
    %v1800 = vsub.f32 1.5, %v1799
    %v1801 = vmul.f32 %v1796, %v1800
    %vm1802 = vweird.f32 %v1763
    %vm1803 = vweird.f32 %v1796
    %vm1804 = vmor %vm1802, %vm1803
    %v1805 = vsel %vm1804, %v1796, %v1801
    %v1806 = vrsqrt.pop %v1764
    %v1807 = vmul.f32 %v1806, %v1764
    %v1808 = vmul.f32 %v1807, %v1806
    %v1809 = vmul.f32 0.5, %v1808
    %v1810 = vsub.f32 1.5, %v1809
    %v1811 = vmul.f32 %v1806, %v1810
    %vm1812 = vweird.f32 %v1764
    %vm1813 = vweird.f32 %v1806
    %vm1814 = vmor %vm1812, %vm1813
    %v1815 = vsel %vm1814, %v1806, %v1811
    %v1816 = vrsqrt.pop %v1765
    %v1817 = vmul.f32 %v1816, %v1765
    %v1818 = vmul.f32 %v1817, %v1816
    %v1819 = vmul.f32 0.5, %v1818
    %v1820 = vsub.f32 1.5, %v1819
    %v1821 = vmul.f32 %v1816, %v1820
    %vm1822 = vweird.f32 %v1765
    %vm1823 = vweird.f32 %v1816
    %vm1824 = vmor %vm1822, %vm1823
    %v1825 = vsel %vm1824, %v1816, %v1821
    %v1826 = vmul.f32 %v1742, %v1775
    %v1827 = vmul.f32 %v1743, %v1785
    %v1828 = vmul.f32 %v1744, %v1795
    %v1829 = vmul.f32 %v1745, %v1805
    %v1830 = vmul.f32 %v1746, %v1815
    %v1831 = vmul.f32 %v1747, %v1825
    %v1832 = vperm.slane %v1114, 6
    %v1833 = vmul.f32 %v1826, %v1832
    %v1834 = vmul.f32 %v1827, %v1832
    %v1835 = vmul.f32 %v1828, %v1832
    %v1836 = vmul.f32 %v1829, %v1832
    %v1837 = vmul.f32 %v1830, %v1832
    %v1838 = vmul.f32 %v1831, %v1832
    %v1839 = vperm.slane %v1114, 7
    %v1840 = vadd.f32 %v1833, %v1839
    %v1841 = vadd.f32 %v1834, %v1839
    %v1842 = vadd.f32 %v1835, %v1839
    %v1843 = vadd.f32 %v1836, %v1839
    %v1844 = vadd.f32 %v1837, %v1839
    %v1845 = vadd.f32 %v1838, %v1839
    %v1846 = vld [vmem:[%s9] sm:$0x1]
    %v1847 = vld [vmem:[%s9 + $0x1] sm:$0x1]
    %v1848 = vperm.slane %v1846, 0
    %v1849 = vmul.f32 %v1840, %v1848
    %v1850 = vmul.f32 %v1841, %v1848
    %v1851 = vmul.f32 %v1842, %v1848
    %v1852 = vmul.f32 %v1843, %v1848
    %v1853 = vmul.f32 %v1844, %v1848
    %v1854 = vmul.f32 %v1845, %v1848
    %v1855 = vsel %vm57, %v1849, 0.0
    %1856 = vadd.xlane.f32.xlu0 %v1855
    %v1857 = vpop.xlane.xlu0 %1856
    %v1858 = vsel %vm57, %v1850, 0.0
    %1859 = vadd.xlane.f32.xlu0 %v1858
    %v1860 = vpop.xlane.xlu0 %1859
    %v1861 = vsel %vm57, %v1851, 0.0
    %1862 = vadd.xlane.f32.xlu0 %v1861
    %v1863 = vpop.xlane.xlu0 %1862
    %v1864 = vsel %vm57, %v1852, 0.0
    %1865 = vadd.xlane.f32.xlu0 %v1864
    %v1866 = vpop.xlane.xlu0 %1865
    %v1867 = vsel %vm57, %v1853, 0.0
    %1868 = vadd.xlane.f32.xlu0 %v1867
    %v1869 = vpop.xlane.xlu0 %1868
    %v1870 = vsel %vm57, %v1854, 0.0
    %1871 = vadd.xlane.f32.xlu0 %v1870
    %v1872 = vpop.xlane.xlu0 %1871
    %v1873 = vperm.slane %v1847, 0
    %v1874 = vadd.f32 %v1857, %v1873
    %v1875 = vadd.f32 %v1860, %v1873
    %v1876 = vadd.f32 %v1863, %v1873
    %v1877 = vadd.f32 %v1866, %v1873
    %v1878 = vadd.f32 %v1869, %v1873
    %v1879 = vadd.f32 %v1872, %v1873
    %v1880 = vtanh.pop %v1874
    %v1881 = vtanh.pop %v1875
    %v1882 = vtanh.pop %v1876
    %v1883 = vtanh.pop %v1877
    %v1884 = vtanh.pop %v1878
    %v1885 = vtanh.pop %v1879
    %vm1886 = vcmask 7168
    %1887 = vst.msk [vmem:[%s10] sm:$0xff] %vm1886, %v1880
    %1888 = vst.msk [vmem:[%s10 + $0x8] sm:$0xff] %vm1886, %v1881
    %1889 = vst.msk [vmem:[%s10 + $0x10] sm:$0xff] %vm1886, %v1882
    %1890 = vst.msk [vmem:[%s10 + $0x18] sm:$0xff] %vm1886, %v1883
    %1891 = vst.msk [vmem:[%s10 + $0x20] sm:$0xff] %vm1886, %v1884
    %1892 = vst.msk [vmem:[%s10 + $0x28] sm:$0xff] %vm1886, %v1885
    // Predicated region
    $region46: #{gpdt_v2_forward.1} parent=1 // pred_check
      _
    $region47: #{gpdt_v2_forward.1} parent=1 // pred_check_branch
      %1894 = sbr.rel (0) target = $region49
    $region48: #{gpdt_v2_forward.1} parent=1 // pred_region
      _
    $region49: #{gpdt_v2_forward.1} parent=1 // pred_fallthru
      _
    // Predicated region
    $region50: #{gpdt_v2_forward.1} parent=1 // pred_check
      _
    $region51: #{gpdt_v2_forward.1} parent=1 // pred_check_branch
      %1896 = sbr.rel (0) target = $region53
    $region52: #{gpdt_v2_forward.1} parent=1 // pred_region
      _
    $region53: #{gpdt_v2_forward.1} parent=1 // pred_fallthru
      _
    %1897 = vsyncpa [#allocation3], 1

</llo_original>
